<compile_context>
chip_gen: v7x
topology: tpu7x:2x2x1
jax: 0.10.0
libtpu: 0.0.40
codegen_flags: <defaults>
</compile_context>

<pallas_src>
import jax
import jax.numpy as jnp
from jax import lax
from jax.experimental import pallas as pl
from jax.experimental.pallas import tpu as pltpu

# small, self-consistent config (SimpleLSTMConfig analog)
VOCAB = 64
EMB = 32
HID = 32
SEQ = 8
BATCH = 2
NCLS = 5
OUT_LANES = 128  # lane-dense padded output width


def bilstm_attn_kernel(ids_ref,     # (T*B, 2) int32   [fwd_id, VOCAB + bwd_id] per time-major row
                       wcomb_ref,   # (2V, 8H) bf16    rows 0:V -> fwd gate cols, V:2V -> bwd gate cols
                       whh_ref,     # (2H, 8H) bf16    block-diag, gate-major [i_f,i_b|f_f,f_b|o_f,o_b|g_f,g_b]
                       b_ref,       # (1, 8H)  f32     gate-major combined bias
                       aw_ref,      # (1, 2H)  f32
                       ab_ref,      # (1, 1)   f32
                       fcw_ref,     # (2H, 128) bf16   (padded, zeros beyond NCLS)
                       fcb_ref,     # (1, 128)  f32    (padded)
                       out_ref):    # (B, 128)  f32
    TB = ids_ref.shape[0]
    V2 = wcomb_ref.shape[0]          # 2 * VOCAB
    H8 = wcomb_ref.shape[1]          # 8H
    H2 = H8 // 4                     # 2H
    H = H2 // 2
    B = out_ref.shape[0]
    T = TB // B

    # ---- fused embedding gather + input projection: one-hot @ (emb @ W_ih), single MXU pass.
    ids = ids_ref[...]                                           # (TB, 2) int32
    col = lax.broadcasted_iota(jnp.int32, (TB, V2), 1)
    hit = jnp.logical_or(col == ids[:, 0:1], col == ids[:, 1:2])
    onehot = jnp.where(hit, 1.0, 0.0).astype(jnp.bfloat16)       # (TB, 2V)
    gates_x = jnp.dot(onehot, wcomb_ref[...],
                      preferred_element_type=jnp.float32) + b_ref[...]   # (TB, 8H) f32

    # ---- fused bi-directional recurrence, fully unrolled, register-resident outputs.
    whh = whh_ref[...]
    h = jnp.zeros((B, H2), jnp.float32)      # [h_fwd | h_bwd]
    c = jnp.zeros((B, H2), jnp.float32)      # [c_fwd | c_bwd]
    fwd_h = []                               # fwd_h[s]: h_fwd at time s
    bwd_h = []                               # bwd_h[s]: h_bwd at original time T-1-s
    for s in range(T):
        gates = gates_x[s * B:(s + 1) * B, :] + jnp.dot(
            h.astype(jnp.bfloat16), whh, preferred_element_type=jnp.float32)   # (B, 8H)
        # gate-major (i, f, o, g): sigmoid on the first 3*2H cols, tanh on the last 2H.
        sig = jax.nn.sigmoid(gates[:, 0:3 * H2])
        g_g = jnp.tanh(gates[:, 3 * H2:4 * H2])
        i_g = sig[:, 0:H2]
        f_g = sig[:, H2:2 * H2]
        o_g = sig[:, 2 * H2:3 * H2]
        c = f_g * c + i_g * g_g
        h = o_g * jnp.tanh(c)
        fwd_h.append(h[:, 0:H])
        bwd_h.append(h[:, H:H2])

    # ---- attention (tanh(Linear(.)), softmax over the sequence axis) + FC, all in vregs.
    aw = aw_ref[...]
    aw_f = aw[:, 0:H]
    aw_b = aw[:, H:H2]
    ab = ab_ref[...]

    exps = []
    denom = jnp.zeros((B, 1), jnp.float32)
    for t in range(T):
        s_t = jnp.sum(fwd_h[t] * aw_f + bwd_h[T - 1 - t] * aw_b,
                      axis=-1, keepdims=True) + ab               # (B, 1)
        e_t = jnp.exp(jnp.tanh(s_t))    # scores are tanh-bounded -> no max-shift needed
        exps.append(e_t)
        denom = denom + e_t
    inv = pl.reciprocal(denom, approx=True)                      # (B, 1)

    ctx_f = jnp.zeros((B, H), jnp.float32)
    ctx_b = jnp.zeros((B, H), jnp.float32)
    for t in range(T):
        w_t = exps[t] * inv
        ctx_f = ctx_f + w_t * fwd_h[t]
        ctx_b = ctx_b + w_t * bwd_h[T - 1 - t]
    ctx = jnp.concatenate([ctx_f, ctx_b], axis=1)                # (B, 2H)

    out_ref[...] = (jnp.dot(ctx.astype(jnp.bfloat16), fcw_ref[...],
                            preferred_element_type=jnp.float32) + fcb_ref[...])


def _reorder_ifog(w, H):
    """columns [i | f | g | o] (PyTorch order) -> [i | f | o | g]."""
    return jnp.concatenate([w[:, 0:H], w[:, H:2 * H],
                            w[:, 3 * H:4 * H], w[:, 2 * H:3 * H]], axis=1)


def _interleave_dirs(wf, wb, H):
    """(D,4H) fwd + (D,4H) bwd (gate order i,f,o,g) -> (D, 8H) gate-major
    column layout [i_f,i_b | f_f,f_b | o_f,o_b | g_f,g_b]."""
    parts = []
    for g in range(4):
        parts.append(wf[:, g * H:(g + 1) * H])
        parts.append(wb[:, g * H:(g + 1) * H])
    return jnp.concatenate(parts, axis=1)


def bilstm_attn(x_ids, p):
    B, T = x_ids.shape
    H, C = HID, NCLS
    H2 = 2 * H
    f32, bf16 = jnp.float32, jnp.bfloat16

    # token-id plumbing: time-major rows; bwd ids offset by VOCAB to address the bwd
    # half of w_comb. Row t*B+b = [x[b, t], VOCAB + x[b, T-1-t]].
    ids_i = x_ids.astype(jnp.int32)
    ids_f = ids_i.T.reshape(T * B, 1)
    ids_b = ids_i[:, ::-1].T.reshape(T * B, 1) + VOCAB
    ids2 = jnp.concatenate([ids_f, ids_b], axis=1)               # (T*B, 2)

    # weight prep (pure layout/algebra plumbing, done once per parameter set)
    emb = p["emb"].astype(f32)
    comb_f = _reorder_ifog(emb @ p["wih_f"], H)                  # (V, 4H) = emb @ W_ih (fwd)
    comb_b = _reorder_ifog(emb @ p["wih_b"], H)
    zV = jnp.zeros_like(comb_f)
    w_comb = jnp.concatenate([_interleave_dirs(comb_f, zV, H),
                              _interleave_dirs(zV, comb_b, H)], axis=0).astype(bf16)  # (2V, 8H)

    whh_f = _reorder_ifog(p["whh_f"], H)
    whh_b = _reorder_ifog(p["whh_b"], H)
    zH = jnp.zeros_like(whh_f)
    w_hh = jnp.concatenate([_interleave_dirs(whh_f, zH, H),
                            _interleave_dirs(zH, whh_b, H)], axis=0).astype(bf16)     # (2H, 8H)

    bias = _interleave_dirs(_reorder_ifog(p["b_f"], H),
                            _reorder_ifog(p["b_b"], H), H).astype(f32)                # (1, 8H)

    fcw_pad = jnp.zeros((H2, OUT_LANES), f32).at[:, :C].set(p["fc_w"]).astype(bf16)
    fcb_pad = jnp.zeros((1, OUT_LANES), f32).at[:, :C].set(p["fc_b"])

    vmem = pl.BlockSpec(memory_space=pltpu.MemorySpace.VMEM)
    args = (ids2, w_comb, w_hh, bias,
            p["attn_w"].astype(f32), p["attn_b"].astype(f32), fcw_pad, fcb_pad)

    # Single gridless invocation: the 8-step recurrence is strictly serial and all
    # operands are tiny and VMEM-resident, so no grid / tiling / batch split is used.
    out_padded = pl.pallas_call(
        bilstm_attn_kernel,
        out_shape=jax.ShapeDtypeStruct((B, OUT_LANES), f32),
        in_specs=[vmem] * len(args),
        out_specs=vmem,
    )(*args)
    return out_padded[:, :C]


def init_params(key):
    ks = jax.random.split(key, 12)
    s = 0.1
    emb = jax.random.normal(ks[0], (VOCAB, EMB), jnp.float32) * s

    def lstm_dir(k1, k2, k3, k4):
        wih = jax.random.normal(k1, (EMB, 4 * HID), jnp.float32) * s   # W_ih^T
        whh = jax.random.normal(k2, (HID, 4 * HID), jnp.float32) * s   # W_hh^T
        b_ih = jax.random.normal(k3, (1, 4 * HID), jnp.float32) * s
        b_hh = jax.random.normal(k4, (1, 4 * HID), jnp.float32) * s
        return wih, whh, b_ih + b_hh

    wih_f, whh_f, b_f = lstm_dir(ks[1], ks[2], ks[3], ks[4])
    wih_b, whh_b, b_b = lstm_dir(ks[5], ks[6], ks[7], ks[8])
    attn_w = jax.random.normal(ks[9], (1, 2 * HID), jnp.float32) * s
    attn_b = jnp.full((1, 1), 0.01, jnp.float32)
    fc_w = jax.random.normal(ks[10], (2 * HID, NCLS), jnp.float32) * s
    fc_b = jax.random.normal(ks[11], (1, NCLS), jnp.float32) * s
    return dict(emb=emb, wih_f=wih_f, whh_f=whh_f, b_f=b_f,
                wih_b=wih_b, whh_b=whh_b, b_b=b_b,
                attn_w=attn_w, attn_b=attn_b, fc_w=fc_w, fc_b=fc_b)


def reference(x_ids, p):
    # pure-JAX reference mirroring the PyTorch forward pass (f32 throughout)
    emb = jnp.take(p["emb"], x_ids, axis=0)            # (B, T, E)
    xs = jnp.transpose(emb, (1, 0, 2))                 # (T, B, E)

    def run_dir(inputs, wih, whh, b):
        B = inputs.shape[1]

        def step(carry, x_t):
            h, c = carry
            gates = x_t @ wih + h @ whh + b
            i, f, g, o = jnp.split(gates, 4, axis=-1)
            c = jax.nn.sigmoid(f) * c + jax.nn.sigmoid(i) * jnp.tanh(g)
            h = jax.nn.sigmoid(o) * jnp.tanh(c)
            return (h, c), h

        init = (jnp.zeros((B, HID), jnp.float32), jnp.zeros((B, HID), jnp.float32))
        _, hs = jax.lax.scan(step, init, inputs)
        return hs                                      # (T, B, H)

    fwd = run_dir(xs, p["wih_f"], p["whh_f"], p["b_f"])
    bwd = run_dir(xs[::-1], p["wih_b"], p["whh_b"], p["b_b"])[::-1]
    lstm_out = jnp.concatenate([fwd, bwd], axis=-1)    # (T, B, 2H)
    scores = jnp.tanh(jnp.sum(lstm_out * p["attn_w"][None], axis=-1, keepdims=True)
                      + p["attn_b"])
    w = jax.nn.softmax(scores, axis=0)
    ctx = jnp.sum(w * lstm_out, axis=0)                # (B, 2H)
    return ctx @ p["fc_w"] + p["fc_b"]


if __name__ == "__main__":
    key = jax.random.PRNGKey(0)
    pk, xk = jax.random.split(key)
    params = init_params(pk)
    x = jax.random.randint(xk, (BATCH, SEQ), 0, VOCAB, dtype=jnp.int32)

    out = bilstm_attn(x, params)
    out = jax.block_until_ready(out)

    ref = reference(x, params)
    assert out.shape == (BATCH, NCLS)
    assert jnp.allclose(out, ref, atol=5e-2, rtol=5e-2), (out, ref)
    print("KERNEL_OK")
</pallas_src>

<mosaic_0001>
module attributes {stable_mosaic.version = 11 : i64} {
  func.func @bilstm_attn_kernel(%arg0: memref<16x2xi32, #tpu.memory_space<vmem>>, %arg1: memref<128x256xbf16, #tpu.memory_space<vmem>>, %arg2: memref<64x256xbf16, #tpu.memory_space<vmem>>, %arg3: memref<1x256xf32, #tpu.memory_space<vmem>>, %arg4: memref<1x64xf32, #tpu.memory_space<vmem>>, %arg5: memref<1x1xf32, #tpu.memory_space<vmem>>, %arg6: memref<64x128xbf16, #tpu.memory_space<vmem>>, %arg7: memref<1x128xf32, #tpu.memory_space<vmem>>, %arg8: memref<2x128xf32, #tpu.memory_space<vmem>>) attributes {dimension_semantics = [], scalar_prefetch = 0 : i64, scratch_operands = 0 : i64, tpu.core_type = #tpu.core_type<tc>} {
    %c0 = arith.constant 0 : index
    %c0_0 = arith.constant 0 : index
    %0 = vector.load %arg0[%c0, %c0_0] : memref<16x2xi32, #tpu.memory_space<vmem>>, vector<16x2xi32>
    %1 = tpu.iota {dimensions = array<i32: 1>} : vector<16x128xi32>
    %2 = vector.extract_strided_slice %0 {offsets = [0, 0], sizes = [16, 1], strides = [1, 1]} : vector<16x2xi32> to vector<16x1xi32>
    %3 = vector.broadcast %2 : vector<16x1xi32> to vector<16x128xi32>
    %4 = arith.cmpi eq, %1, %3 : vector<16x128xi32>
    %5 = vector.extract_strided_slice %0 {offsets = [0, 1], sizes = [16, 1], strides = [1, 1]} : vector<16x2xi32> to vector<16x1xi32>
    %6 = vector.broadcast %5 : vector<16x1xi32> to vector<16x128xi32>
    %7 = arith.cmpi eq, %1, %6 : vector<16x128xi32>
    %8 = arith.ori %4, %7 : vector<16x128xi1>
    %cst = arith.constant 1.000000e+00 : f32
    %cst_1 = arith.constant 0.000000e+00 : f32
    %9 = vector.broadcast %cst : f32 to vector<16x128xf32>
    %10 = vector.broadcast %cst_1 : f32 to vector<16x128xf32>
    %11 = arith.select %8, %9, %10 : vector<16x128xi1>, vector<16x128xf32>
    %12 = arith.truncf %11 : vector<16x128xf32> to vector<16x128xbf16>
    %c0_2 = arith.constant 0 : index
    %c0_3 = arith.constant 0 : index
    %13 = vector.load %arg1[%c0_2, %c0_3] : memref<128x256xbf16, #tpu.memory_space<vmem>>, vector<128x256xbf16>
    %cst_4 = arith.constant dense<0.000000e+00> : vector<16x256xf32>
    %14 = tpu.matmul %12, %13, %cst_4 {dimension_numbers = #tpu.dot_dimension_numbers<[1], [0], [0], [1], [0, 0, 1, 1], [], []>} : vector<16x128xbf16>, vector<128x256xbf16>, vector<16x256xf32> -> vector<16x256xf32>
    %c0_5 = arith.constant 0 : index
    %c0_6 = arith.constant 0 : index
    %15 = vector.load %arg3[%c0_5, %c0_6] : memref<1x256xf32, #tpu.memory_space<vmem>>, vector<1x256xf32>
    %16 = vector.broadcast %15 : vector<1x256xf32> to vector<16x256xf32>
    %17 = arith.addf %14, %16 : vector<16x256xf32>
    %c0_7 = arith.constant 0 : index
    %c0_8 = arith.constant 0 : index
    %18 = vector.load %arg2[%c0_7, %c0_8] : memref<64x256xbf16, #tpu.memory_space<vmem>>, vector<64x256xbf16>
    %cst_9 = arith.constant 0.000000e+00 : f32
    %19 = vector.broadcast %cst_9 : f32 to vector<2x64xf32>
    %cst_10 = arith.constant 0.000000e+00 : f32
    %20 = vector.broadcast %cst_10 : f32 to vector<2x64xf32>
    %21 = vector.extract_strided_slice %17 {offsets = [0, 0], sizes = [2, 256], strides = [1, 1]} : vector<16x256xf32> to vector<2x256xf32>
    %22 = arith.truncf %19 : vector<2x64xf32> to vector<2x64xbf16>
    %cst_11 = arith.constant dense<0.000000e+00> : vector<2x256xf32>
    %23 = tpu.matmul %22, %18, %cst_11 {dimension_numbers = #tpu.dot_dimension_numbers<[1], [0], [0], [1], [0, 0, 1, 1], [], []>} : vector<2x64xbf16>, vector<64x256xbf16>, vector<2x256xf32> -> vector<2x256xf32>
    %24 = arith.addf %21, %23 : vector<2x256xf32>
    %25 = vector.extract_strided_slice %24 {offsets = [0, 0], sizes = [2, 192], strides = [1, 1]} : vector<2x256xf32> to vector<2x192xf32>
    %26 = arith.negf %25 : vector<2x192xf32>
    %27 = math.exp %26 : vector<2x192xf32>
    %cst_12 = arith.constant 1.000000e+00 : f32
    %28 = vector.broadcast %cst_12 : f32 to vector<2x192xf32>
    %29 = arith.addf %28, %27 : vector<2x192xf32>
    %30 = arith.divf %28, %29 : vector<2x192xf32>
    %31 = vector.extract_strided_slice %24 {offsets = [0, 192], sizes = [2, 64], strides = [1, 1]} : vector<2x256xf32> to vector<2x64xf32>
    %32 = math.tanh %31 : vector<2x64xf32>
    %33 = vector.extract_strided_slice %30 {offsets = [0, 0], sizes = [2, 64], strides = [1, 1]} : vector<2x192xf32> to vector<2x64xf32>
    %34 = vector.extract_strided_slice %30 {offsets = [0, 64], sizes = [2, 64], strides = [1, 1]} : vector<2x192xf32> to vector<2x64xf32>
    %35 = vector.extract_strided_slice %30 {offsets = [0, 128], sizes = [2, 64], strides = [1, 1]} : vector<2x192xf32> to vector<2x64xf32>
    %36 = arith.mulf %34, %20 : vector<2x64xf32>
    %37 = arith.mulf %33, %32 : vector<2x64xf32>
    %38 = arith.addf %36, %37 : vector<2x64xf32>
    %39 = math.tanh %38 : vector<2x64xf32>
    %40 = arith.mulf %35, %39 : vector<2x64xf32>
    %41 = vector.extract_strided_slice %40 {offsets = [0, 0], sizes = [2, 32], strides = [1, 1]} : vector<2x64xf32> to vector<2x32xf32>
    %42 = vector.extract_strided_slice %40 {offsets = [0, 32], sizes = [2, 32], strides = [1, 1]} : vector<2x64xf32> to vector<2x32xf32>
    %43 = vector.extract_strided_slice %17 {offsets = [2, 0], sizes = [2, 256], strides = [1, 1]} : vector<16x256xf32> to vector<2x256xf32>
    %44 = arith.truncf %40 : vector<2x64xf32> to vector<2x64xbf16>
    %cst_13 = arith.constant dense<0.000000e+00> : vector<2x256xf32>
    %45 = tpu.matmul %44, %18, %cst_13 {dimension_numbers = #tpu.dot_dimension_numbers<[1], [0], [0], [1], [0, 0, 1, 1], [], []>} : vector<2x64xbf16>, vector<64x256xbf16>, vector<2x256xf32> -> vector<2x256xf32>
    %46 = arith.addf %43, %45 : vector<2x256xf32>
    %47 = vector.extract_strided_slice %46 {offsets = [0, 0], sizes = [2, 192], strides = [1, 1]} : vector<2x256xf32> to vector<2x192xf32>
    %48 = arith.negf %47 : vector<2x192xf32>
    %49 = math.exp %48 : vector<2x192xf32>
    %cst_14 = arith.constant 1.000000e+00 : f32
    %50 = vector.broadcast %cst_14 : f32 to vector<2x192xf32>
    %51 = arith.addf %50, %49 : vector<2x192xf32>
    %52 = arith.divf %50, %51 : vector<2x192xf32>
    %53 = vector.extract_strided_slice %46 {offsets = [0, 192], sizes = [2, 64], strides = [1, 1]} : vector<2x256xf32> to vector<2x64xf32>
    %54 = math.tanh %53 : vector<2x64xf32>
    %55 = vector.extract_strided_slice %52 {offsets = [0, 0], sizes = [2, 64], strides = [1, 1]} : vector<2x192xf32> to vector<2x64xf32>
    %56 = vector.extract_strided_slice %52 {offsets = [0, 64], sizes = [2, 64], strides = [1, 1]} : vector<2x192xf32> to vector<2x64xf32>
    %57 = vector.extract_strided_slice %52 {offsets = [0, 128], sizes = [2, 64], strides = [1, 1]} : vector<2x192xf32> to vector<2x64xf32>
    %58 = arith.mulf %56, %38 : vector<2x64xf32>
    %59 = arith.mulf %55, %54 : vector<2x64xf32>
    %60 = arith.addf %58, %59 : vector<2x64xf32>
    %61 = math.tanh %60 : vector<2x64xf32>
    %62 = arith.mulf %57, %61 : vector<2x64xf32>
    %63 = vector.extract_strided_slice %62 {offsets = [0, 0], sizes = [2, 32], strides = [1, 1]} : vector<2x64xf32> to vector<2x32xf32>
    %64 = vector.extract_strided_slice %62 {offsets = [0, 32], sizes = [2, 32], strides = [1, 1]} : vector<2x64xf32> to vector<2x32xf32>
    %65 = vector.extract_strided_slice %17 {offsets = [4, 0], sizes = [2, 256], strides = [1, 1]} : vector<16x256xf32> to vector<2x256xf32>
    %66 = arith.truncf %62 : vector<2x64xf32> to vector<2x64xbf16>
    %cst_15 = arith.constant dense<0.000000e+00> : vector<2x256xf32>
    %67 = tpu.matmul %66, %18, %cst_15 {dimension_numbers = #tpu.dot_dimension_numbers<[1], [0], [0], [1], [0, 0, 1, 1], [], []>} : vector<2x64xbf16>, vector<64x256xbf16>, vector<2x256xf32> -> vector<2x256xf32>
    %68 = arith.addf %65, %67 : vector<2x256xf32>
    %69 = vector.extract_strided_slice %68 {offsets = [0, 0], sizes = [2, 192], strides = [1, 1]} : vector<2x256xf32> to vector<2x192xf32>
    %70 = arith.negf %69 : vector<2x192xf32>
    %71 = math.exp %70 : vector<2x192xf32>
    %cst_16 = arith.constant 1.000000e+00 : f32
    %72 = vector.broadcast %cst_16 : f32 to vector<2x192xf32>
    %73 = arith.addf %72, %71 : vector<2x192xf32>
    %74 = arith.divf %72, %73 : vector<2x192xf32>
    %75 = vector.extract_strided_slice %68 {offsets = [0, 192], sizes = [2, 64], strides = [1, 1]} : vector<2x256xf32> to vector<2x64xf32>
    %76 = math.tanh %75 : vector<2x64xf32>
    %77 = vector.extract_strided_slice %74 {offsets = [0, 0], sizes = [2, 64], strides = [1, 1]} : vector<2x192xf32> to vector<2x64xf32>
    %78 = vector.extract_strided_slice %74 {offsets = [0, 64], sizes = [2, 64], strides = [1, 1]} : vector<2x192xf32> to vector<2x64xf32>
    %79 = vector.extract_strided_slice %74 {offsets = [0, 128], sizes = [2, 64], strides = [1, 1]} : vector<2x192xf32> to vector<2x64xf32>
    %80 = arith.mulf %78, %60 : vector<2x64xf32>
    %81 = arith.mulf %77, %76 : vector<2x64xf32>
    %82 = arith.addf %80, %81 : vector<2x64xf32>
    %83 = math.tanh %82 : vector<2x64xf32>
    %84 = arith.mulf %79, %83 : vector<2x64xf32>
    %85 = vector.extract_strided_slice %84 {offsets = [0, 0], sizes = [2, 32], strides = [1, 1]} : vector<2x64xf32> to vector<2x32xf32>
    %86 = vector.extract_strided_slice %84 {offsets = [0, 32], sizes = [2, 32], strides = [1, 1]} : vector<2x64xf32> to vector<2x32xf32>
    %87 = vector.extract_strided_slice %17 {offsets = [6, 0], sizes = [2, 256], strides = [1, 1]} : vector<16x256xf32> to vector<2x256xf32>
    %88 = arith.truncf %84 : vector<2x64xf32> to vector<2x64xbf16>
    %cst_17 = arith.constant dense<0.000000e+00> : vector<2x256xf32>
    %89 = tpu.matmul %88, %18, %cst_17 {dimension_numbers = #tpu.dot_dimension_numbers<[1], [0], [0], [1], [0, 0, 1, 1], [], []>} : vector<2x64xbf16>, vector<64x256xbf16>, vector<2x256xf32> -> vector<2x256xf32>
    %90 = arith.addf %87, %89 : vector<2x256xf32>
    %91 = vector.extract_strided_slice %90 {offsets = [0, 0], sizes = [2, 192], strides = [1, 1]} : vector<2x256xf32> to vector<2x192xf32>
    %92 = arith.negf %91 : vector<2x192xf32>
    %93 = math.exp %92 : vector<2x192xf32>
    %cst_18 = arith.constant 1.000000e+00 : f32
    %94 = vector.broadcast %cst_18 : f32 to vector<2x192xf32>
    %95 = arith.addf %94, %93 : vector<2x192xf32>
    %96 = arith.divf %94, %95 : vector<2x192xf32>
    %97 = vector.extract_strided_slice %90 {offsets = [0, 192], sizes = [2, 64], strides = [1, 1]} : vector<2x256xf32> to vector<2x64xf32>
    %98 = math.tanh %97 : vector<2x64xf32>
    %99 = vector.extract_strided_slice %96 {offsets = [0, 0], sizes = [2, 64], strides = [1, 1]} : vector<2x192xf32> to vector<2x64xf32>
    %100 = vector.extract_strided_slice %96 {offsets = [0, 64], sizes = [2, 64], strides = [1, 1]} : vector<2x192xf32> to vector<2x64xf32>
    %101 = vector.extract_strided_slice %96 {offsets = [0, 128], sizes = [2, 64], strides = [1, 1]} : vector<2x192xf32> to vector<2x64xf32>
    %102 = arith.mulf %100, %82 : vector<2x64xf32>
    %103 = arith.mulf %99, %98 : vector<2x64xf32>
    %104 = arith.addf %102, %103 : vector<2x64xf32>
    %105 = math.tanh %104 : vector<2x64xf32>
    %106 = arith.mulf %101, %105 : vector<2x64xf32>
    %107 = vector.extract_strided_slice %106 {offsets = [0, 0], sizes = [2, 32], strides = [1, 1]} : vector<2x64xf32> to vector<2x32xf32>
    %108 = vector.extract_strided_slice %106 {offsets = [0, 32], sizes = [2, 32], strides = [1, 1]} : vector<2x64xf32> to vector<2x32xf32>
    %109 = vector.extract_strided_slice %17 {offsets = [8, 0], sizes = [2, 256], strides = [1, 1]} : vector<16x256xf32> to vector<2x256xf32>
    %110 = arith.truncf %106 : vector<2x64xf32> to vector<2x64xbf16>
    %cst_19 = arith.constant dense<0.000000e+00> : vector<2x256xf32>
    %111 = tpu.matmul %110, %18, %cst_19 {dimension_numbers = #tpu.dot_dimension_numbers<[1], [0], [0], [1], [0, 0, 1, 1], [], []>} : vector<2x64xbf16>, vector<64x256xbf16>, vector<2x256xf32> -> vector<2x256xf32>
    %112 = arith.addf %109, %111 : vector<2x256xf32>
    %113 = vector.extract_strided_slice %112 {offsets = [0, 0], sizes = [2, 192], strides = [1, 1]} : vector<2x256xf32> to vector<2x192xf32>
    %114 = arith.negf %113 : vector<2x192xf32>
    %115 = math.exp %114 : vector<2x192xf32>
    %cst_20 = arith.constant 1.000000e+00 : f32
    %116 = vector.broadcast %cst_20 : f32 to vector<2x192xf32>
    %117 = arith.addf %116, %115 : vector<2x192xf32>
    %118 = arith.divf %116, %117 : vector<2x192xf32>
    %119 = vector.extract_strided_slice %112 {offsets = [0, 192], sizes = [2, 64], strides = [1, 1]} : vector<2x256xf32> to vector<2x64xf32>
    %120 = math.tanh %119 : vector<2x64xf32>
    %121 = vector.extract_strided_slice %118 {offsets = [0, 0], sizes = [2, 64], strides = [1, 1]} : vector<2x192xf32> to vector<2x64xf32>
    %122 = vector.extract_strided_slice %118 {offsets = [0, 64], sizes = [2, 64], strides = [1, 1]} : vector<2x192xf32> to vector<2x64xf32>
    %123 = vector.extract_strided_slice %118 {offsets = [0, 128], sizes = [2, 64], strides = [1, 1]} : vector<2x192xf32> to vector<2x64xf32>
    %124 = arith.mulf %122, %104 : vector<2x64xf32>
    %125 = arith.mulf %121, %120 : vector<2x64xf32>
    %126 = arith.addf %124, %125 : vector<2x64xf32>
    %127 = math.tanh %126 : vector<2x64xf32>
    %128 = arith.mulf %123, %127 : vector<2x64xf32>
    %129 = vector.extract_strided_slice %128 {offsets = [0, 0], sizes = [2, 32], strides = [1, 1]} : vector<2x64xf32> to vector<2x32xf32>
    %130 = vector.extract_strided_slice %128 {offsets = [0, 32], sizes = [2, 32], strides = [1, 1]} : vector<2x64xf32> to vector<2x32xf32>
    %131 = vector.extract_strided_slice %17 {offsets = [10, 0], sizes = [2, 256], strides = [1, 1]} : vector<16x256xf32> to vector<2x256xf32>
    %132 = arith.truncf %128 : vector<2x64xf32> to vector<2x64xbf16>
    %cst_21 = arith.constant dense<0.000000e+00> : vector<2x256xf32>
    %133 = tpu.matmul %132, %18, %cst_21 {dimension_numbers = #tpu.dot_dimension_numbers<[1], [0], [0], [1], [0, 0, 1, 1], [], []>} : vector<2x64xbf16>, vector<64x256xbf16>, vector<2x256xf32> -> vector<2x256xf32>
    %134 = arith.addf %131, %133 : vector<2x256xf32>
    %135 = vector.extract_strided_slice %134 {offsets = [0, 0], sizes = [2, 192], strides = [1, 1]} : vector<2x256xf32> to vector<2x192xf32>
    %136 = arith.negf %135 : vector<2x192xf32>
    %137 = math.exp %136 : vector<2x192xf32>
    %cst_22 = arith.constant 1.000000e+00 : f32
    %138 = vector.broadcast %cst_22 : f32 to vector<2x192xf32>
    %139 = arith.addf %138, %137 : vector<2x192xf32>
    %140 = arith.divf %138, %139 : vector<2x192xf32>
    %141 = vector.extract_strided_slice %134 {offsets = [0, 192], sizes = [2, 64], strides = [1, 1]} : vector<2x256xf32> to vector<2x64xf32>
    %142 = math.tanh %141 : vector<2x64xf32>
    %143 = vector.extract_strided_slice %140 {offsets = [0, 0], sizes = [2, 64], strides = [1, 1]} : vector<2x192xf32> to vector<2x64xf32>
    %144 = vector.extract_strided_slice %140 {offsets = [0, 64], sizes = [2, 64], strides = [1, 1]} : vector<2x192xf32> to vector<2x64xf32>
    %145 = vector.extract_strided_slice %140 {offsets = [0, 128], sizes = [2, 64], strides = [1, 1]} : vector<2x192xf32> to vector<2x64xf32>
    %146 = arith.mulf %144, %126 : vector<2x64xf32>
    %147 = arith.mulf %143, %142 : vector<2x64xf32>
    %148 = arith.addf %146, %147 : vector<2x64xf32>
    %149 = math.tanh %148 : vector<2x64xf32>
    %150 = arith.mulf %145, %149 : vector<2x64xf32>
    %151 = vector.extract_strided_slice %150 {offsets = [0, 0], sizes = [2, 32], strides = [1, 1]} : vector<2x64xf32> to vector<2x32xf32>
    %152 = vector.extract_strided_slice %150 {offsets = [0, 32], sizes = [2, 32], strides = [1, 1]} : vector<2x64xf32> to vector<2x32xf32>
    %153 = vector.extract_strided_slice %17 {offsets = [12, 0], sizes = [2, 256], strides = [1, 1]} : vector<16x256xf32> to vector<2x256xf32>
    %154 = arith.truncf %150 : vector<2x64xf32> to vector<2x64xbf16>
    %cst_23 = arith.constant dense<0.000000e+00> : vector<2x256xf32>
    %155 = tpu.matmul %154, %18, %cst_23 {dimension_numbers = #tpu.dot_dimension_numbers<[1], [0], [0], [1], [0, 0, 1, 1], [], []>} : vector<2x64xbf16>, vector<64x256xbf16>, vector<2x256xf32> -> vector<2x256xf32>
    %156 = arith.addf %153, %155 : vector<2x256xf32>
    %157 = vector.extract_strided_slice %156 {offsets = [0, 0], sizes = [2, 192], strides = [1, 1]} : vector<2x256xf32> to vector<2x192xf32>
    %158 = arith.negf %157 : vector<2x192xf32>
    %159 = math.exp %158 : vector<2x192xf32>
    %cst_24 = arith.constant 1.000000e+00 : f32
    %160 = vector.broadcast %cst_24 : f32 to vector<2x192xf32>
    %161 = arith.addf %160, %159 : vector<2x192xf32>
    %162 = arith.divf %160, %161 : vector<2x192xf32>
    %163 = vector.extract_strided_slice %156 {offsets = [0, 192], sizes = [2, 64], strides = [1, 1]} : vector<2x256xf32> to vector<2x64xf32>
    %164 = math.tanh %163 : vector<2x64xf32>
    %165 = vector.extract_strided_slice %162 {offsets = [0, 0], sizes = [2, 64], strides = [1, 1]} : vector<2x192xf32> to vector<2x64xf32>
    %166 = vector.extract_strided_slice %162 {offsets = [0, 64], sizes = [2, 64], strides = [1, 1]} : vector<2x192xf32> to vector<2x64xf32>
    %167 = vector.extract_strided_slice %162 {offsets = [0, 128], sizes = [2, 64], strides = [1, 1]} : vector<2x192xf32> to vector<2x64xf32>
    %168 = arith.mulf %166, %148 : vector<2x64xf32>
    %169 = arith.mulf %165, %164 : vector<2x64xf32>
    %170 = arith.addf %168, %169 : vector<2x64xf32>
    %171 = math.tanh %170 : vector<2x64xf32>
    %172 = arith.mulf %167, %171 : vector<2x64xf32>
    %173 = vector.extract_strided_slice %172 {offsets = [0, 0], sizes = [2, 32], strides = [1, 1]} : vector<2x64xf32> to vector<2x32xf32>
    %174 = vector.extract_strided_slice %172 {offsets = [0, 32], sizes = [2, 32], strides = [1, 1]} : vector<2x64xf32> to vector<2x32xf32>
    %175 = vector.extract_strided_slice %17 {offsets = [14, 0], sizes = [2, 256], strides = [1, 1]} : vector<16x256xf32> to vector<2x256xf32>
    %176 = arith.truncf %172 : vector<2x64xf32> to vector<2x64xbf16>
    %cst_25 = arith.constant dense<0.000000e+00> : vector<2x256xf32>
    %177 = tpu.matmul %176, %18, %cst_25 {dimension_numbers = #tpu.dot_dimension_numbers<[1], [0], [0], [1], [0, 0, 1, 1], [], []>} : vector<2x64xbf16>, vector<64x256xbf16>, vector<2x256xf32> -> vector<2x256xf32>
    %178 = arith.addf %175, %177 : vector<2x256xf32>
    %179 = vector.extract_strided_slice %178 {offsets = [0, 0], sizes = [2, 192], strides = [1, 1]} : vector<2x256xf32> to vector<2x192xf32>
    %180 = arith.negf %179 : vector<2x192xf32>
    %181 = math.exp %180 : vector<2x192xf32>
    %cst_26 = arith.constant 1.000000e+00 : f32
    %182 = vector.broadcast %cst_26 : f32 to vector<2x192xf32>
    %183 = arith.addf %182, %181 : vector<2x192xf32>
    %184 = arith.divf %182, %183 : vector<2x192xf32>
    %185 = vector.extract_strided_slice %178 {offsets = [0, 192], sizes = [2, 64], strides = [1, 1]} : vector<2x256xf32> to vector<2x64xf32>
    %186 = math.tanh %185 : vector<2x64xf32>
    %187 = vector.extract_strided_slice %184 {offsets = [0, 0], sizes = [2, 64], strides = [1, 1]} : vector<2x192xf32> to vector<2x64xf32>
    %188 = vector.extract_strided_slice %184 {offsets = [0, 64], sizes = [2, 64], strides = [1, 1]} : vector<2x192xf32> to vector<2x64xf32>
    %189 = vector.extract_strided_slice %184 {offsets = [0, 128], sizes = [2, 64], strides = [1, 1]} : vector<2x192xf32> to vector<2x64xf32>
    %190 = arith.mulf %188, %170 : vector<2x64xf32>
    %191 = arith.mulf %187, %186 : vector<2x64xf32>
    %192 = arith.addf %190, %191 : vector<2x64xf32>
    %193 = math.tanh %192 : vector<2x64xf32>
    %194 = arith.mulf %189, %193 : vector<2x64xf32>
    %195 = vector.extract_strided_slice %194 {offsets = [0, 0], sizes = [2, 32], strides = [1, 1]} : vector<2x64xf32> to vector<2x32xf32>
    %196 = vector.extract_strided_slice %194 {offsets = [0, 32], sizes = [2, 32], strides = [1, 1]} : vector<2x64xf32> to vector<2x32xf32>
    %c0_27 = arith.constant 0 : index
    %c0_28 = arith.constant 0 : index
    %197 = vector.load %arg4[%c0_27, %c0_28] : memref<1x64xf32, #tpu.memory_space<vmem>>, vector<1x64xf32>
    %198 = vector.extract_strided_slice %197 {offsets = [0, 0], sizes = [1, 32], strides = [1, 1]} : vector<1x64xf32> to vector<1x32xf32>
    %199 = vector.extract_strided_slice %197 {offsets = [0, 32], sizes = [1, 32], strides = [1, 1]} : vector<1x64xf32> to vector<1x32xf32>
    %c0_29 = arith.constant 0 : index
    %c0_30 = arith.constant 0 : index
    %200 = vector.load %arg5[%c0_29, %c0_30] : memref<1x1xf32, #tpu.memory_space<vmem>>, vector<1x1xf32>
    %cst_31 = arith.constant 0.000000e+00 : f32
    %201 = vector.broadcast %cst_31 : f32 to vector<2x1xf32>
    %202 = vector.broadcast %198 : vector<1x32xf32> to vector<2x32xf32>
    %203 = arith.mulf %41, %202 : vector<2x32xf32>
    %204 = vector.broadcast %199 : vector<1x32xf32> to vector<2x32xf32>
    %205 = arith.mulf %196, %204 : vector<2x32xf32>
    %206 = arith.addf %203, %205 : vector<2x32xf32>
    %cst_32 = arith.constant dense<0.000000e+00> : vector<2xf32>
    %207 = vector.multi_reduction <add>, %206, %cst_32 [1] : vector<2x32xf32> to vector<2xf32>
    %208 = vector.shape_cast %207 : vector<2xf32> to vector<2x1xf32>
    %209 = vector.broadcast %200 : vector<1x1xf32> to vector<2x1xf32>
    %210 = arith.addf %208, %209 : vector<2x1xf32>
    %211 = math.tanh %210 : vector<2x1xf32>
    %212 = math.exp %211 : vector<2x1xf32>
    %213 = arith.addf %201, %212 : vector<2x1xf32>
    %214 = vector.broadcast %198 : vector<1x32xf32> to vector<2x32xf32>
    %215 = arith.mulf %63, %214 : vector<2x32xf32>
    %216 = vector.broadcast %199 : vector<1x32xf32> to vector<2x32xf32>
    %217 = arith.mulf %174, %216 : vector<2x32xf32>
    %218 = arith.addf %215, %217 : vector<2x32xf32>
    %cst_33 = arith.constant dense<0.000000e+00> : vector<2xf32>
    %219 = vector.multi_reduction <add>, %218, %cst_33 [1] : vector<2x32xf32> to vector<2xf32>
    %220 = vector.shape_cast %219 : vector<2xf32> to vector<2x1xf32>
    %221 = vector.broadcast %200 : vector<1x1xf32> to vector<2x1xf32>
    %222 = arith.addf %220, %221 : vector<2x1xf32>
    %223 = math.tanh %222 : vector<2x1xf32>
    %224 = math.exp %223 : vector<2x1xf32>
    %225 = arith.addf %213, %224 : vector<2x1xf32>
    %226 = vector.broadcast %198 : vector<1x32xf32> to vector<2x32xf32>
    %227 = arith.mulf %85, %226 : vector<2x32xf32>
    %228 = vector.broadcast %199 : vector<1x32xf32> to vector<2x32xf32>
    %229 = arith.mulf %152, %228 : vector<2x32xf32>
    %230 = arith.addf %227, %229 : vector<2x32xf32>
    %cst_34 = arith.constant dense<0.000000e+00> : vector<2xf32>
    %231 = vector.multi_reduction <add>, %230, %cst_34 [1] : vector<2x32xf32> to vector<2xf32>
    %232 = vector.shape_cast %231 : vector<2xf32> to vector<2x1xf32>
    %233 = vector.broadcast %200 : vector<1x1xf32> to vector<2x1xf32>
    %234 = arith.addf %232, %233 : vector<2x1xf32>
    %235 = math.tanh %234 : vector<2x1xf32>
    %236 = math.exp %235 : vector<2x1xf32>
    %237 = arith.addf %225, %236 : vector<2x1xf32>
    %238 = vector.broadcast %198 : vector<1x32xf32> to vector<2x32xf32>
    %239 = arith.mulf %107, %238 : vector<2x32xf32>
    %240 = vector.broadcast %199 : vector<1x32xf32> to vector<2x32xf32>
    %241 = arith.mulf %130, %240 : vector<2x32xf32>
    %242 = arith.addf %239, %241 : vector<2x32xf32>
    %cst_35 = arith.constant dense<0.000000e+00> : vector<2xf32>
    %243 = vector.multi_reduction <add>, %242, %cst_35 [1] : vector<2x32xf32> to vector<2xf32>
    %244 = vector.shape_cast %243 : vector<2xf32> to vector<2x1xf32>
    %245 = vector.broadcast %200 : vector<1x1xf32> to vector<2x1xf32>
    %246 = arith.addf %244, %245 : vector<2x1xf32>
    %247 = math.tanh %246 : vector<2x1xf32>
    %248 = math.exp %247 : vector<2x1xf32>
    %249 = arith.addf %237, %248 : vector<2x1xf32>
    %250 = vector.broadcast %198 : vector<1x32xf32> to vector<2x32xf32>
    %251 = arith.mulf %129, %250 : vector<2x32xf32>
    %252 = vector.broadcast %199 : vector<1x32xf32> to vector<2x32xf32>
    %253 = arith.mulf %108, %252 : vector<2x32xf32>
    %254 = arith.addf %251, %253 : vector<2x32xf32>
    %cst_36 = arith.constant dense<0.000000e+00> : vector<2xf32>
    %255 = vector.multi_reduction <add>, %254, %cst_36 [1] : vector<2x32xf32> to vector<2xf32>
    %256 = vector.shape_cast %255 : vector<2xf32> to vector<2x1xf32>
    %257 = vector.broadcast %200 : vector<1x1xf32> to vector<2x1xf32>
    %258 = arith.addf %256, %257 : vector<2x1xf32>
    %259 = math.tanh %258 : vector<2x1xf32>
    %260 = math.exp %259 : vector<2x1xf32>
    %261 = arith.addf %249, %260 : vector<2x1xf32>
    %262 = vector.broadcast %198 : vector<1x32xf32> to vector<2x32xf32>
    %263 = arith.mulf %151, %262 : vector<2x32xf32>
    %264 = vector.broadcast %199 : vector<1x32xf32> to vector<2x32xf32>
    %265 = arith.mulf %86, %264 : vector<2x32xf32>
    %266 = arith.addf %263, %265 : vector<2x32xf32>
    %cst_37 = arith.constant dense<0.000000e+00> : vector<2xf32>
    %267 = vector.multi_reduction <add>, %266, %cst_37 [1] : vector<2x32xf32> to vector<2xf32>
    %268 = vector.shape_cast %267 : vector<2xf32> to vector<2x1xf32>
    %269 = vector.broadcast %200 : vector<1x1xf32> to vector<2x1xf32>
    %270 = arith.addf %268, %269 : vector<2x1xf32>
    %271 = math.tanh %270 : vector<2x1xf32>
    %272 = math.exp %271 : vector<2x1xf32>
    %273 = arith.addf %261, %272 : vector<2x1xf32>
    %274 = vector.broadcast %198 : vector<1x32xf32> to vector<2x32xf32>
    %275 = arith.mulf %173, %274 : vector<2x32xf32>
    %276 = vector.broadcast %199 : vector<1x32xf32> to vector<2x32xf32>
    %277 = arith.mulf %64, %276 : vector<2x32xf32>
    %278 = arith.addf %275, %277 : vector<2x32xf32>
    %cst_38 = arith.constant dense<0.000000e+00> : vector<2xf32>
    %279 = vector.multi_reduction <add>, %278, %cst_38 [1] : vector<2x32xf32> to vector<2xf32>
    %280 = vector.shape_cast %279 : vector<2xf32> to vector<2x1xf32>
    %281 = vector.broadcast %200 : vector<1x1xf32> to vector<2x1xf32>
    %282 = arith.addf %280, %281 : vector<2x1xf32>
    %283 = math.tanh %282 : vector<2x1xf32>
    %284 = math.exp %283 : vector<2x1xf32>
    %285 = arith.addf %273, %284 : vector<2x1xf32>
    %286 = vector.broadcast %198 : vector<1x32xf32> to vector<2x32xf32>
    %287 = arith.mulf %195, %286 : vector<2x32xf32>
    %288 = vector.broadcast %199 : vector<1x32xf32> to vector<2x32xf32>
    %289 = arith.mulf %42, %288 : vector<2x32xf32>
    %290 = arith.addf %287, %289 : vector<2x32xf32>
    %cst_39 = arith.constant dense<0.000000e+00> : vector<2xf32>
    %291 = vector.multi_reduction <add>, %290, %cst_39 [1] : vector<2x32xf32> to vector<2xf32>
    %292 = vector.shape_cast %291 : vector<2xf32> to vector<2x1xf32>
    %293 = vector.broadcast %200 : vector<1x1xf32> to vector<2x1xf32>
    %294 = arith.addf %292, %293 : vector<2x1xf32>
    %295 = math.tanh %294 : vector<2x1xf32>
    %296 = math.exp %295 : vector<2x1xf32>
    %297 = arith.addf %285, %296 : vector<2x1xf32>
    %298 = tpu.reciprocal %297 {approx = true} : vector<2x1xf32> -> vector<2x1xf32>
    %cst_40 = arith.constant 0.000000e+00 : f32
    %299 = vector.broadcast %cst_40 : f32 to vector<2x32xf32>
    %cst_41 = arith.constant 0.000000e+00 : f32
    %300 = vector.broadcast %cst_41 : f32 to vector<2x32xf32>
    %301 = arith.mulf %212, %298 : vector<2x1xf32>
    %302 = vector.broadcast %301 : vector<2x1xf32> to vector<2x32xf32>
    %303 = arith.mulf %302, %41 : vector<2x32xf32>
    %304 = arith.addf %299, %303 : vector<2x32xf32>
    %305 = vector.broadcast %301 : vector<2x1xf32> to vector<2x32xf32>
    %306 = arith.mulf %305, %196 : vector<2x32xf32>
    %307 = arith.addf %300, %306 : vector<2x32xf32>
    %308 = arith.mulf %224, %298 : vector<2x1xf32>
    %309 = vector.broadcast %308 : vector<2x1xf32> to vector<2x32xf32>
    %310 = arith.mulf %309, %63 : vector<2x32xf32>
    %311 = arith.addf %304, %310 : vector<2x32xf32>
    %312 = vector.broadcast %308 : vector<2x1xf32> to vector<2x32xf32>
    %313 = arith.mulf %312, %174 : vector<2x32xf32>
    %314 = arith.addf %307, %313 : vector<2x32xf32>
    %315 = arith.mulf %236, %298 : vector<2x1xf32>
    %316 = vector.broadcast %315 : vector<2x1xf32> to vector<2x32xf32>
    %317 = arith.mulf %316, %85 : vector<2x32xf32>
    %318 = arith.addf %311, %317 : vector<2x32xf32>
    %319 = vector.broadcast %315 : vector<2x1xf32> to vector<2x32xf32>
    %320 = arith.mulf %319, %152 : vector<2x32xf32>
    %321 = arith.addf %314, %320 : vector<2x32xf32>
    %322 = arith.mulf %248, %298 : vector<2x1xf32>
    %323 = vector.broadcast %322 : vector<2x1xf32> to vector<2x32xf32>
    %324 = arith.mulf %323, %107 : vector<2x32xf32>
    %325 = arith.addf %318, %324 : vector<2x32xf32>
    %326 = vector.broadcast %322 : vector<2x1xf32> to vector<2x32xf32>
    %327 = arith.mulf %326, %130 : vector<2x32xf32>
    %328 = arith.addf %321, %327 : vector<2x32xf32>
    %329 = arith.mulf %260, %298 : vector<2x1xf32>
    %330 = vector.broadcast %329 : vector<2x1xf32> to vector<2x32xf32>
    %331 = arith.mulf %330, %129 : vector<2x32xf32>
    %332 = arith.addf %325, %331 : vector<2x32xf32>
    %333 = vector.broadcast %329 : vector<2x1xf32> to vector<2x32xf32>
    %334 = arith.mulf %333, %108 : vector<2x32xf32>
    %335 = arith.addf %328, %334 : vector<2x32xf32>
    %336 = arith.mulf %272, %298 : vector<2x1xf32>
    %337 = vector.broadcast %336 : vector<2x1xf32> to vector<2x32xf32>
    %338 = arith.mulf %337, %151 : vector<2x32xf32>
    %339 = arith.addf %332, %338 : vector<2x32xf32>
    %340 = vector.broadcast %336 : vector<2x1xf32> to vector<2x32xf32>
    %341 = arith.mulf %340, %86 : vector<2x32xf32>
    %342 = arith.addf %335, %341 : vector<2x32xf32>
    %343 = arith.mulf %284, %298 : vector<2x1xf32>
    %344 = vector.broadcast %343 : vector<2x1xf32> to vector<2x32xf32>
    %345 = arith.mulf %344, %173 : vector<2x32xf32>
    %346 = arith.addf %339, %345 : vector<2x32xf32>
    %347 = vector.broadcast %343 : vector<2x1xf32> to vector<2x32xf32>
    %348 = arith.mulf %347, %64 : vector<2x32xf32>
    %349 = arith.addf %342, %348 : vector<2x32xf32>
    %350 = arith.mulf %296, %298 : vector<2x1xf32>
    %351 = vector.broadcast %350 : vector<2x1xf32> to vector<2x32xf32>
    %352 = arith.mulf %351, %195 : vector<2x32xf32>
    %353 = arith.addf %346, %352 : vector<2x32xf32>
    %354 = vector.broadcast %350 : vector<2x1xf32> to vector<2x32xf32>
    %355 = arith.mulf %354, %42 : vector<2x32xf32>
    %356 = arith.addf %349, %355 : vector<2x32xf32>
    %357 = tpu.concatenate %353, %356 in 1 : vector<2x32xf32>, vector<2x32xf32> -> vector<2x64xf32>
    %358 = arith.truncf %357 : vector<2x64xf32> to vector<2x64xbf16>
    %c0_42 = arith.constant 0 : index
    %c0_43 = arith.constant 0 : index
    %359 = vector.load %arg6[%c0_42, %c0_43] : memref<64x128xbf16, #tpu.memory_space<vmem>>, vector<64x128xbf16>
    %cst_44 = arith.constant dense<0.000000e+00> : vector<2x128xf32>
    %360 = tpu.matmul %358, %359, %cst_44 {dimension_numbers = #tpu.dot_dimension_numbers<[1], [0], [0], [1], [0, 0, 1, 1], [], []>} : vector<2x64xbf16>, vector<64x128xbf16>, vector<2x128xf32> -> vector<2x128xf32>
    %c0_45 = arith.constant 0 : index
    %c0_46 = arith.constant 0 : index
    %361 = vector.load %arg7[%c0_45, %c0_46] : memref<1x128xf32, #tpu.memory_space<vmem>>, vector<1x128xf32>
    %362 = vector.broadcast %361 : vector<1x128xf32> to vector<2x128xf32>
    %363 = arith.addf %360, %362 : vector<2x128xf32>
    %c0_47 = arith.constant 0 : index
    %c0_48 = arith.constant 0 : index
    %364 = vector.load %arg8[%c0_47, %c0_48] : memref<2x128xf32, #tpu.memory_space<vmem>>, vector<2x128xf32>
    tpu.vector_store %arg8[%c0_47, %c0_48], %363 {strides = array<i32>} : memref<2x128xf32, #tpu.memory_space<vmem>>, vector<2x128xf32>,
    return
  }
}

</mosaic_0001>

<llo_original>
// kernel: tpu_custom_call.1
$region0: #{tpu_custom_call.1}
  #allocation0 [shape = 'u32[]', space=smem, size = 0x4, offset = 0x4, fixed_abs, tag = 'smem constant byte address 0x4 - core index']
  #allocation1 [shape = 'u32[144,128]{1,0:T(1,128)}', space=vmem, size = 0x12000, scoped, tag = 'internal scratch']
  #allocation2 [shape = 'f32[1,1]{1,0:T(1,128)S(1)}', space=vmem, size = 0x200, scoped, tag = 'scoped memory for tpu_custom_call.1']
  %s0 = inlined_call_operand.vmem [shape: s32[16,2], index: 0, kind: input, shape index: {}]
  %s1 = inlined_call_operand.hbm [shape: bf16[128,256], index: 1, kind: input, shape index: {}]
  %s2 = inlined_call_operand.hbm [shape: bf16[64,256], index: 2, kind: input, shape index: {}]
  %s3 = inlined_call_operand.vmem [shape: f32[1,256], index: 3, kind: input, shape index: {}]
  %s4 = inlined_call_operand.vmem [shape: f32[1,64], index: 4, kind: input, shape index: {}]
  %s5 = inlined_call_operand.<no memory space> [shape: f32[1,1], index: 5, kind: input, shape index: {}]
  %s6 = inlined_call_operand.vmem [shape: bf16[64,128], index: 6, kind: input, shape index: {}]
  %s7 = inlined_call_operand.vmem [shape: f32[1,128], index: 7, kind: input, shape index: {}]
  %s8 = inlined_call_operand.hbm [shape: f32[2,128], index: 8, kind: output, shape index: {}]
  %s9 = sld [smem:[#allocation0]]
  $region50: #{tpu_custom_call.1} parent=0
    _
  %s11 = ssub.s32 1, %s9
  %s12 = scalar_select 0, %s11, %s9
  %v13 = vstv %s5
  %14 = vst [vmem:[#allocation2] sm:$0x1] %v13
  $region1: #{tpu_custom_call.1} parent=0
    #allocation3 [shape = 'u8[65536]{0}', space=vmem, size = 0x10000, scoped, tag = 'input window, operand 1, single buffered']
    #allocation4 [shape = 's32[1]{0}', space=sflag, size = 0x4, scoped, tag = 'scoped memory for tpu_custom_call.1']
    #allocation5 [shape = 's32[1]{0}', space=sflag, size = 0x4, scoped, tag = 'scoped memory for tpu_custom_call.1']
    #allocation6 [shape = 'u8[32768]{0}', space=vmem, size = 0x8000, scoped, tag = 'input window, operand 2, single buffered']
    #allocation7 [shape = 's32[1]{0}', space=sflag, size = 0x4, scoped, tag = 'scoped memory for tpu_custom_call.1']
    #allocation8 [shape = 'u8[1024]{0}', space=vmem, size = 0x400, scoped, tag = 'output window, operand 0, single buffered']
    %15 = vsyncpa [#allocation4], 0
    %16 = vsyncpa [#allocation7], 0
    %17 = vsyncpa [#allocation5], 0
    // Predicated region
    $region2: #{tpu_custom_call.1} parent=1 // pred_check
      _
    $region3: #{tpu_custom_call.1} parent=1 // pred_check_branch
      %19 = sbr.rel (0) target = $region5
    $region4: #{tpu_custom_call.1} parent=1 // pred_region
      _
    $region5: #{tpu_custom_call.1} parent=1 // pred_fallthru
      _
    // Predicated region
    $region6: #{tpu_custom_call.1} parent=1 // pred_check
      _
    $region7: #{tpu_custom_call.1} parent=1 // pred_check_branch
      %21 = sbr.rel (0) target = $region9
    $region8: #{tpu_custom_call.1} parent=1 // pred_region
      %s23 = ssub.s32 2048, 2048
      %24 = vsyncadd [#allocation4], %s23
      %s25 = sshll.u32 [#allocation3], 4
      %s26 = int_to_ptr.vmem [resolvable:$true] %s25
      %31 = dma.hbm_to_vmem [thread:$0]  %s1, 2048, %s26, [#allocation4], 128, 128, 8
    $region9: #{tpu_custom_call.1} parent=1 // pred_fallthru
      _
    // Predicated region
    $region10: #{tpu_custom_call.1} parent=1 // pred_check
      _
    $region11: #{tpu_custom_call.1} parent=1 // pred_check_branch
      %33 = sbr.rel (0) target = $region13
    $region12: #{tpu_custom_call.1} parent=1 // pred_region
      %s35 = ssub.s32 1024, 1024
      %36 = vsyncadd [#allocation7], %s35
      %s37 = sshll.u32 [#allocation6], 4
      %s38 = int_to_ptr.vmem [resolvable:$true] %s37
      %43 = dma.hbm_to_vmem [thread:$0]  %s2, 1024, %s38, [#allocation7], 128, 128, 8
    $region13: #{tpu_custom_call.1} parent=1 // pred_fallthru
      _
    // Predicated region
    $region14: #{tpu_custom_call.1} parent=1 // pred_check
      _
    $region15: #{tpu_custom_call.1} parent=1 // pred_check_branch
      %45 = sbr.rel (0) target = $region17
    $region16: #{tpu_custom_call.1} parent=1 // pred_region
      _
    $region17: #{tpu_custom_call.1} parent=1 // pred_fallthru
      _
    // Predicated region
    $region18: #{tpu_custom_call.1} parent=1 // pred_check
      _
    $region19: #{tpu_custom_call.1} parent=1 // pred_check_branch
      %47 = sbr.rel (0) target = $region21
    $region20: #{tpu_custom_call.1} parent=1 // pred_region
      _
    $region21: #{tpu_custom_call.1} parent=1 // pred_fallthru
      _
    // Predicated region
    $region22: #{tpu_custom_call.1} parent=1 // pred_check
      _
    $region23: #{tpu_custom_call.1} parent=1 // pred_check_branch
      %49 = sbr.rel (0) target = $region25
    $region24: #{tpu_custom_call.1} parent=1 // pred_region
      _
    $region25: #{tpu_custom_call.1} parent=1 // pred_fallthru
      _
    // Predicated region
    $region26: #{tpu_custom_call.1} parent=1 // pred_check
      _
    $region27: #{tpu_custom_call.1} parent=1 // pred_check_branch
      %51 = sbr.rel (0) target = $region29
    $region28: #{tpu_custom_call.1} parent=1 // pred_region
      _
    $region29: #{tpu_custom_call.1} parent=1 // pred_fallthru
      _
    // Predicated region
    $region30: #{tpu_custom_call.1} parent=1 // pred_check
      _
    $region31: #{tpu_custom_call.1} parent=1 // pred_check_branch
      %53 = sbr.rel (0) target = $region33
    $region32: #{tpu_custom_call.1} parent=1 // pred_region
      _
    $region33: #{tpu_custom_call.1} parent=1 // pred_fallthru
      _
    // Predicated region
    $region34: #{tpu_custom_call.1} parent=1 // pred_check
      _
    $region35: #{tpu_custom_call.1} parent=1 // pred_check_branch
      %55 = sbr.rel (0) target = $region37
    $region36: #{tpu_custom_call.1} parent=1 // pred_region
      %56 = dma.done [#allocation4], 2048
    $region37: #{tpu_custom_call.1} parent=1 // pred_fallthru
      _
    // Predicated region
    $region38: #{tpu_custom_call.1} parent=1 // pred_check
      _
    $region39: #{tpu_custom_call.1} parent=1 // pred_check_branch
      %58 = sbr.rel (0) target = $region41
    $region40: #{tpu_custom_call.1} parent=1 // pred_region
      %59 = dma.done [#allocation7], 1024
    $region41: #{tpu_custom_call.1} parent=1 // pred_fallthru
      _
    %v61 = vld [vmem:[%s0] sm:$0xff]
    %v62 = vld [vmem:[%s0 + $0x8] sm:$0xff]
    %v63 = vlaneseq
    %v64 = vand.u32 %v63, 127
    %65 = vset.pattern.permute.xlu0 0
    %66 = vperm.xlu0 %65, %v61
    %v67 = vpop.permute.xlu0 %66
    %68 = vset.pattern.permute.xlu0 0
    %69 = vperm.xlu0 %68, %v62
    %v70 = vpop.permute.xlu0 %69
    %vm71 = vcmp.eq.s32.totalorder %v64, %v67
    %vm72 = vcmp.eq.s32.totalorder %v64, %v70
    %73 = vset.pattern.permute.xlu0 1
    %74 = vperm.xlu0 %73, %v61
    %v75 = vpop.permute.xlu0 %74
    %76 = vset.pattern.permute.xlu0 1
    %77 = vperm.xlu0 %76, %v62
    %v78 = vpop.permute.xlu0 %77
    %vm79 = vcmp.eq.s32.totalorder %v64, %v75
    %vm80 = vcmp.eq.s32.totalorder %v64, %v78
    %vm81 = vmor %vm71, %vm79
    %vm82 = vmor %vm72, %vm80
    %v83 = vsel %vm81, 1.0, 0.0
    %v84 = vsel %vm82, 1.0, 0.0
    %v85 = vpack.c.bf16 %v84, %v83
    %v86 = vld [vmem:[#allocation3] sm:$0xff]
    %v87 = vld [vmem:[#allocation3 + $0x8] sm:$0xff]
    %v88 = vld [vmem:[#allocation3 + $0x10] sm:$0xff]
    %v89 = vld [vmem:[#allocation3 + $0x18] sm:$0xff]
    %v90 = vld [vmem:[#allocation3 + $0x20] sm:$0xff]
    %v91 = vld [vmem:[#allocation3 + $0x28] sm:$0xff]
    %v92 = vld [vmem:[#allocation3 + $0x30] sm:$0xff]
    %v93 = vld [vmem:[#allocation3 + $0x38] sm:$0xff]
    %v94 = vld [vmem:[#allocation3 + $0x40] sm:$0xff]
    %v95 = vld [vmem:[#allocation3 + $0x48] sm:$0xff]
    %v96 = vld [vmem:[#allocation3 + $0x50] sm:$0xff]
    %v97 = vld [vmem:[#allocation3 + $0x58] sm:$0xff]
    %v98 = vld [vmem:[#allocation3 + $0x60] sm:$0xff]
    %v99 = vld [vmem:[#allocation3 + $0x68] sm:$0xff]
    %v100 = vld [vmem:[#allocation3 + $0x70] sm:$0xff]
    %v101 = vld [vmem:[#allocation3 + $0x78] sm:$0xff]
    %v102 = vld [vmem:[%s3] sm:$0x3]
    %v104 = vlaneseq
    %v105 = vshrl.u32 %v104, 7
    %v106 = vsub.s32 0, %v105
    %v107 = vrot.slane %v102, %v106
    %v108 = vlaneseq
    %v109 = vshrl.u32 %v108, 7
    %v110 = vsub.s32 1, %v109
    %v111 = vrot.slane %v102, %v110
    %v130 = vunpack.c.l.b16 %v86
    %v131 = vunpack.c.h.b16 %v86
    %v132 = vunpack.c.l.b16 %v87
    %v133 = vunpack.c.h.b16 %v87
    %v134 = vunpack.c.l.b16 %v88
    %v135 = vunpack.c.h.b16 %v88
    %v136 = vunpack.c.l.b16 %v89
    %v137 = vunpack.c.h.b16 %v89
    %v138 = vunpack.c.l.b16 %v90
    %v139 = vunpack.c.h.b16 %v90
    %v140 = vunpack.c.l.b16 %v91
    %v141 = vunpack.c.h.b16 %v91
    %v142 = vunpack.c.l.b16 %v92
    %v143 = vunpack.c.h.b16 %v92
    %v144 = vunpack.c.l.b16 %v93
    %v145 = vunpack.c.h.b16 %v93
    %v146 = vunpack.c.l.b16 %v94
    %v147 = vunpack.c.h.b16 %v94
    %v148 = vunpack.c.l.b16 %v95
    %v149 = vunpack.c.h.b16 %v95
    %v150 = vunpack.c.l.b16 %v96
    %v151 = vunpack.c.h.b16 %v96
    %v152 = vunpack.c.l.b16 %v97
    %v153 = vunpack.c.h.b16 %v97
    %v154 = vunpack.c.l.b16 %v98
    %v155 = vunpack.c.h.b16 %v98
    %v156 = vunpack.c.l.b16 %v99
    %v157 = vunpack.c.h.b16 %v99
    %v158 = vunpack.c.l.b16 %v100
    %v159 = vunpack.c.h.b16 %v100
    %v160 = vunpack.c.l.b16 %v101
    %v161 = vunpack.c.h.b16 %v101
    %v162 = vpack.c.b16 %v132, %v130
    %v163 = vpack.c.b16 %v133, %v131
    %v164 = vpack.c.b16 %v136, %v134
    %v165 = vpack.c.b16 %v137, %v135
    %v166 = vpack.c.b16 %v140, %v138
    %v167 = vpack.c.b16 %v141, %v139
    %v168 = vpack.c.b16 %v144, %v142
    %v169 = vpack.c.b16 %v145, %v143
    %v170 = vpack.c.b16 %v148, %v146
    %v171 = vpack.c.b16 %v149, %v147
    %v172 = vpack.c.b16 %v152, %v150
    %v173 = vpack.c.b16 %v153, %v151
    %v174 = vpack.c.b16 %v156, %v154
    %v175 = vpack.c.b16 %v157, %v155
    %v176 = vpack.c.b16 %v160, %v158
    %v177 = vpack.c.b16 %v161, %v159
    %194 = vmatprep.subr.bf16.mxu0 %v163
    %195 = vmatpush1.bf16.msra.mxu0 %v162
    %196 = vmatprep.subr.bf16.mxu0 %v165
    %197 = vmatpush1.bf16.msra.mxu0 %v164
    %198 = vmatprep.subr.bf16.mxu0 %v167
    %199 = vmatpush1.bf16.msra.mxu0 %v166
    %200 = vmatprep.subr.bf16.mxu0 %v169
    %201 = vmatpush1.bf16.msra.mxu0 %v168
    %202 = vmatprep.subr.bf16.mxu0 %v171
    %203 = vmatpush1.bf16.msra.mxu0 %v170
    %204 = vmatprep.subr.bf16.mxu0 %v173
    %205 = vmatpush1.bf16.msra.mxu0 %v172
    %206 = vmatprep.subr.bf16.mxu0 %v175
    %207 = vmatpush1.bf16.msra.mxu0 %v174
    %208 = vmatprep.subr.bf16.mxu0 %v177
    %209 = vmatpush1.bf16.msra.mxu0 %v176
    %210 = vmatprep.subr.bf16.mxu0 0
    %211 = vmatpush1.bf16.msra.mxu0 0
    %212 = vmatprep.subr.bf16.mxu0 0
    %213 = vmatpush1.bf16.msra.mxu0 0
    %214 = vmatprep.subr.bf16.mxu0 0
    %215 = vmatpush1.bf16.msra.mxu0 0
    %216 = vmatprep.subr.bf16.mxu0 0
    %217 = vmatpush1.bf16.msra.mxu0 0
    %218 = vmatprep.subr.bf16.mxu0 0
    %219 = vmatpush1.bf16.msra.mxu0 0
    %220 = vmatprep.subr.bf16.mxu0 0
    %221 = vmatpush1.bf16.msra.mxu0 0
    %222 = vmatprep.subr.bf16.mxu0 0
    %223 = vmatpush1.bf16.msra.mxu0 0
    %224 = vmatprep.subr.bf16.mxu0 0
    %225 = vmatpush1.bf16.msra.mxu0 0
    %226 = vmatprep.mubr.bf16.mxu0 0
    %227 = vmatmul.mubr.bf16.gmra.mrb[0].mxu0 %v85
    %v228 = vpop.f32.mrb[0].mxu0
    %v229 = vadd.f32 %v107, %v228
    %v230 = vpop.f32.mrb[0].mxu0
    %v231 = vadd.f32 %v111, %v230
    %v232 = vpop.f32.mrb[0].mxu0
    %v233 = vadd.f32 %v107, %v232
    %v234 = vpop.f32.mrb[0].mxu0
    %v235 = vadd.f32 %v111, %v234
    %236 = vdwg.mxu0
    %v237 = vld [vmem:[#allocation6] sm:$0xff]
    %v238 = vld [vmem:[#allocation6 + $0x8] sm:$0xff]
    %v239 = vld [vmem:[#allocation6 + $0x10] sm:$0xff]
    %v240 = vld [vmem:[#allocation6 + $0x18] sm:$0xff]
    %v241 = vld [vmem:[#allocation6 + $0x20] sm:$0xff]
    %v242 = vld [vmem:[#allocation6 + $0x28] sm:$0xff]
    %v243 = vld [vmem:[#allocation6 + $0x30] sm:$0xff]
    %v244 = vld [vmem:[#allocation6 + $0x38] sm:$0xff]
    %v253 = vunpack.c.l.b16 %v237
    %v254 = vunpack.c.h.b16 %v237
    %v255 = vunpack.c.l.b16 %v238
    %v256 = vunpack.c.h.b16 %v238
    %v257 = vunpack.c.l.b16 %v239
    %v258 = vunpack.c.h.b16 %v239
    %v259 = vunpack.c.l.b16 %v240
    %v260 = vunpack.c.h.b16 %v240
    %v261 = vunpack.c.l.b16 %v241
    %v262 = vunpack.c.h.b16 %v241
    %v263 = vunpack.c.l.b16 %v242
    %v264 = vunpack.c.h.b16 %v242
    %v265 = vunpack.c.l.b16 %v243
    %v266 = vunpack.c.h.b16 %v243
    %v267 = vunpack.c.l.b16 %v244
    %v268 = vunpack.c.h.b16 %v244
    %v269 = vpack.c.b16 %v255, %v253
    %v270 = vpack.c.b16 %v256, %v254
    %v271 = vpack.c.b16 %v259, %v257
    %v272 = vpack.c.b16 %v260, %v258
    %v273 = vpack.c.b16 %v263, %v261
    %v274 = vpack.c.b16 %v264, %v262
    %v275 = vpack.c.b16 %v267, %v265
    %v276 = vpack.c.b16 %v268, %v266
    %vm285 = vcmask 523264
    %v287 = vsel %vm285, 0, 0
    %289 = vmatprep.subr.bf16.mxu0 %v270
    %290 = vmatpush1.bf16.msra.mxu0 %v269
    %291 = vmatprep.subr.bf16.mxu0 %v272
    %292 = vmatpush1.bf16.msra.mxu0 %v271
    %293 = vmatprep.subr.bf16.mxu0 %v274
    %294 = vmatpush1.bf16.msra.mxu0 %v273
    %295 = vmatprep.subr.bf16.mxu0 %v276
    %296 = vmatpush1.bf16.msra.mxu0 %v275
    %297 = vmatprep.subr.bf16.mxu0 0
    %298 = vmatpush1.bf16.msra.mxu0 0
    %299 = vmatprep.subr.bf16.mxu0 0
    %300 = vmatpush1.bf16.msra.mxu0 0
    %301 = vmatprep.subr.bf16.mxu0 0
    %302 = vmatpush1.bf16.msra.mxu0 0
    %303 = vmatprep.subr.bf16.mxu0 0
    %304 = vmatpush1.bf16.msra.mxu0 0
    %305 = vmatprep.subr.bf16.mxu0 0
    %306 = vmatpush1.bf16.msra.mxu0 0
    %307 = vmatprep.subr.bf16.mxu0 0
    %308 = vmatpush1.bf16.msra.mxu0 0
    %309 = vmatprep.subr.bf16.mxu0 0
    %310 = vmatpush1.bf16.msra.mxu0 0
    %311 = vmatprep.subr.bf16.mxu0 0
    %312 = vmatpush1.bf16.msra.mxu0 0
    %313 = vmatprep.subr.bf16.mxu0 0
    %314 = vmatpush1.bf16.msra.mxu0 0
    %315 = vmatprep.subr.bf16.mxu0 0
    %316 = vmatpush1.bf16.msra.mxu0 0
    %317 = vmatprep.subr.bf16.mxu0 0
    %318 = vmatpush1.bf16.msra.mxu0 0
    %319 = vmatprep.subr.bf16.mxu0 0
    %320 = vmatpush1.bf16.msra.mxu0 0
    %321 = vmatprep.mubr.bf16.mxu0 0
    %322 = vmatmul.mubr.bf16.gmra.mrb[0].mxu0 %v287
    %v323 = vpop.f32.mrb[0].mxu0
    %v324 = vadd.f32 0.0, %v323
    %v325 = vpop.f32.mrb[0].mxu0
    %v326 = vadd.f32 0.0, %v325
    %v327 = vpop.f32.mrb[0].mxu0
    %v328 = vpop.f32.mrb[0].mxu0
    %329 = vdwg.mxu0
    %v330 = vadd.f32 %v229, %v324
    %v331 = vadd.f32 %v231, %v326
    %v332 = vxor.u32 %v330, 2147483648
    %v333 = vxor.u32 %v331, 2147483648
    %v334 = vmul.f32 %v332, 1.442695
    %v335 = vpow.pop %v334
    %v336 = vmul.f32 %v333, 1.442695
    %v337 = vpow.pop %v336
    %v338 = vadd.f32 %v335, 1.0
    %v339 = vadd.f32 %v337, 1.0
    %v340 = vrcp.pop %v338
    %v341 = vmul.f32 1.0, %v340
    %v342 = vrcp.pop %v339
    %v343 = vmul.f32 1.0, %v342
    %v344 = vtanh.pop %v331
    %v345 = vmul.f32 %v341, 0.0
    %347 = vrot.lane.b32.xlu0 %v344, 64
    %v348 = vpop.permute.xlu0 %347
    %v350 = vmul.f32 %v341, %v348
    %352 = vrot.lane.b32.xlu0 %v350, 64
    %v353 = vpop.permute.xlu0 %352
    %v355 = vadd.f32 %v345, %v353
    %v356 = vtanh.pop %v355
    %358 = vrot.lane.b32.xlu0 %v356, 64
    %v359 = vpop.permute.xlu0 %358
    %v361 = vmul.f32 %v343, %v359
    %v362 = vpack.c.bf16 %v361, %v361
    %v364 = vsel %vm285, %v362, 0
    %366 = vmatprep.subr.bf16.mxu0 %v270
    %367 = vmatpush1.bf16.msra.mxu0 %v269
    %368 = vmatprep.subr.bf16.mxu0 %v272
    %369 = vmatpush1.bf16.msra.mxu0 %v271
    %370 = vmatprep.subr.bf16.mxu0 %v274
    %371 = vmatpush1.bf16.msra.mxu0 %v273
    %372 = vmatprep.subr.bf16.mxu0 %v276
    %373 = vmatpush1.bf16.msra.mxu0 %v275
    %374 = vmatprep.subr.bf16.mxu0 0
    %375 = vmatpush1.bf16.msra.mxu0 0
    %376 = vmatprep.subr.bf16.mxu0 0
    %377 = vmatpush1.bf16.msra.mxu0 0
    %378 = vmatprep.subr.bf16.mxu0 0
    %379 = vmatpush1.bf16.msra.mxu0 0
    %380 = vmatprep.subr.bf16.mxu0 0
    %381 = vmatpush1.bf16.msra.mxu0 0
    %382 = vmatprep.subr.bf16.mxu0 0
    %383 = vmatpush1.bf16.msra.mxu0 0
    %384 = vmatprep.subr.bf16.mxu0 0
    %385 = vmatpush1.bf16.msra.mxu0 0
    %386 = vmatprep.subr.bf16.mxu0 0
    %387 = vmatpush1.bf16.msra.mxu0 0
    %388 = vmatprep.subr.bf16.mxu0 0
    %389 = vmatpush1.bf16.msra.mxu0 0
    %390 = vmatprep.subr.bf16.mxu0 0
    %391 = vmatpush1.bf16.msra.mxu0 0
    %392 = vmatprep.subr.bf16.mxu0 0
    %393 = vmatpush1.bf16.msra.mxu0 0
    %394 = vmatprep.subr.bf16.mxu0 0
    %395 = vmatpush1.bf16.msra.mxu0 0
    %396 = vmatprep.subr.bf16.mxu0 0
    %397 = vmatpush1.bf16.msra.mxu0 0
    %398 = vmatprep.mubr.bf16.mxu0 0
    %399 = vmatmul.mubr.bf16.gmra.mrb[0].mxu0 %v364
    %v400 = vpop.f32.mrb[0].mxu0
    %v401 = vadd.f32 0.0, %v400
    %v402 = vpop.f32.mrb[0].mxu0
    %v403 = vadd.f32 0.0, %v402
    %v404 = vpop.f32.mrb[0].mxu0
    %v405 = vpop.f32.mrb[0].mxu0
    %406 = vdwg.mxu0
    %v409 = vrot.slane %v401, 6
    %v410 = vrot.slane %v403, 6
    %v413 = vadd.f32 %v229, %v409
    %v414 = vadd.f32 %v231, %v410
    %v415 = vxor.u32 %v413, 2147483648
    %v416 = vxor.u32 %v414, 2147483648
    %v417 = vmul.f32 %v415, 1.442695
    %v418 = vpow.pop %v417
    %v419 = vmul.f32 %v416, 1.442695
    %v420 = vpow.pop %v419
    %v421 = vadd.f32 %v418, 1.0
    %v422 = vadd.f32 %v420, 1.0
    %v423 = vrcp.pop %v421
    %v424 = vmul.f32 1.0, %v423
    %v425 = vrcp.pop %v422
    %v426 = vmul.f32 1.0, %v425
    %v427 = vtanh.pop %v414
    %v429 = vrot.slane %v355, 6
    %v431 = vmul.f32 %v424, %v429
    %433 = vrot.lane.b32.xlu0 %v427, 64
    %v434 = vpop.permute.xlu0 %433
    %v436 = vmul.f32 %v424, %v434
    %438 = vrot.lane.b32.xlu0 %v436, 64
    %v439 = vpop.permute.xlu0 %438
    %v441 = vadd.f32 %v431, %v439
    %v442 = vtanh.pop %v441
    %444 = vrot.lane.b32.xlu0 %v442, 64
    %v445 = vpop.permute.xlu0 %444
    %v447 = vmul.f32 %v426, %v445
    %v448 = vpack.c.bf16 %v447, %v447
    %v450 = vrot.slane %v448, 1
    %v452 = vsel %vm285, %v450, 0
    %454 = vmatprep.subr.bf16.mxu0 %v270
    %455 = vmatpush1.bf16.msra.mxu0 %v269
    %456 = vmatprep.subr.bf16.mxu0 %v272
    %457 = vmatpush1.bf16.msra.mxu0 %v271
    %458 = vmatprep.subr.bf16.mxu0 %v274
    %459 = vmatpush1.bf16.msra.mxu0 %v273
    %460 = vmatprep.subr.bf16.mxu0 %v276
    %461 = vmatpush1.bf16.msra.mxu0 %v275
    %462 = vmatprep.subr.bf16.mxu0 0
    %463 = vmatpush1.bf16.msra.mxu0 0
    %464 = vmatprep.subr.bf16.mxu0 0
    %465 = vmatpush1.bf16.msra.mxu0 0
    %466 = vmatprep.subr.bf16.mxu0 0
    %467 = vmatpush1.bf16.msra.mxu0 0
    %468 = vmatprep.subr.bf16.mxu0 0
    %469 = vmatpush1.bf16.msra.mxu0 0
    %470 = vmatprep.subr.bf16.mxu0 0
    %471 = vmatpush1.bf16.msra.mxu0 0
    %472 = vmatprep.subr.bf16.mxu0 0
    %473 = vmatpush1.bf16.msra.mxu0 0
    %474 = vmatprep.subr.bf16.mxu0 0
    %475 = vmatpush1.bf16.msra.mxu0 0
    %476 = vmatprep.subr.bf16.mxu0 0
    %477 = vmatpush1.bf16.msra.mxu0 0
    %478 = vmatprep.subr.bf16.mxu0 0
    %479 = vmatpush1.bf16.msra.mxu0 0
    %480 = vmatprep.subr.bf16.mxu0 0
    %481 = vmatpush1.bf16.msra.mxu0 0
    %482 = vmatprep.subr.bf16.mxu0 0
    %483 = vmatpush1.bf16.msra.mxu0 0
    %484 = vmatprep.subr.bf16.mxu0 0
    %485 = vmatpush1.bf16.msra.mxu0 0
    %486 = vmatprep.mubr.bf16.mxu0 0
    %487 = vmatmul.mubr.bf16.gmra.mrb[0].mxu0 %v452
    %v488 = vpop.f32.mrb[0].mxu0
    %v489 = vadd.f32 0.0, %v488
    %v490 = vpop.f32.mrb[0].mxu0
    %v491 = vadd.f32 0.0, %v490
    %v492 = vpop.f32.mrb[0].mxu0
    %v493 = vpop.f32.mrb[0].mxu0
    %494 = vdwg.mxu0
    %v497 = vrot.slane %v489, 4
    %v498 = vrot.slane %v491, 4
    %v501 = vadd.f32 %v229, %v497
    %v502 = vadd.f32 %v231, %v498
    %v503 = vxor.u32 %v501, 2147483648
    %v504 = vxor.u32 %v502, 2147483648
    %v505 = vmul.f32 %v503, 1.442695
    %v506 = vpow.pop %v505
    %v507 = vmul.f32 %v504, 1.442695
    %v508 = vpow.pop %v507
    %v509 = vadd.f32 %v506, 1.0
    %v510 = vadd.f32 %v508, 1.0
    %v511 = vrcp.pop %v509
    %v512 = vmul.f32 1.0, %v511
    %v513 = vrcp.pop %v510
    %v514 = vmul.f32 1.0, %v513
    %v515 = vtanh.pop %v502
    %v517 = vrot.slane %v441, 6
    %v519 = vmul.f32 %v512, %v517
    %521 = vrot.lane.b32.xlu0 %v515, 64
    %v522 = vpop.permute.xlu0 %521
    %v524 = vmul.f32 %v512, %v522
    %526 = vrot.lane.b32.xlu0 %v524, 64
    %v527 = vpop.permute.xlu0 %526
    %v529 = vadd.f32 %v519, %v527
    %v530 = vtanh.pop %v529
    %532 = vrot.lane.b32.xlu0 %v530, 64
    %v533 = vpop.permute.xlu0 %532
    %v535 = vmul.f32 %v514, %v533
    %v536 = vpack.c.bf16 %v535, %v535
    %v538 = vrot.slane %v536, 2
    %v540 = vsel %vm285, %v538, 0
    %542 = vmatprep.subr.bf16.mxu0 %v270
    %543 = vmatpush1.bf16.msra.mxu0 %v269
    %544 = vmatprep.subr.bf16.mxu0 %v272
    %545 = vmatpush1.bf16.msra.mxu0 %v271
    %546 = vmatprep.subr.bf16.mxu0 %v274
    %547 = vmatpush1.bf16.msra.mxu0 %v273
    %548 = vmatprep.subr.bf16.mxu0 %v276
    %549 = vmatpush1.bf16.msra.mxu0 %v275
    %550 = vmatprep.subr.bf16.mxu0 0
    %551 = vmatpush1.bf16.msra.mxu0 0
    %552 = vmatprep.subr.bf16.mxu0 0
    %553 = vmatpush1.bf16.msra.mxu0 0
    %554 = vmatprep.subr.bf16.mxu0 0
    %555 = vmatpush1.bf16.msra.mxu0 0
    %556 = vmatprep.subr.bf16.mxu0 0
    %557 = vmatpush1.bf16.msra.mxu0 0
    %558 = vmatprep.subr.bf16.mxu0 0
    %559 = vmatpush1.bf16.msra.mxu0 0
    %560 = vmatprep.subr.bf16.mxu0 0
    %561 = vmatpush1.bf16.msra.mxu0 0
    %562 = vmatprep.subr.bf16.mxu0 0
    %563 = vmatpush1.bf16.msra.mxu0 0
    %564 = vmatprep.subr.bf16.mxu0 0
    %565 = vmatpush1.bf16.msra.mxu0 0
    %566 = vmatprep.subr.bf16.mxu0 0
    %567 = vmatpush1.bf16.msra.mxu0 0
    %568 = vmatprep.subr.bf16.mxu0 0
    %569 = vmatpush1.bf16.msra.mxu0 0
    %570 = vmatprep.subr.bf16.mxu0 0
    %571 = vmatpush1.bf16.msra.mxu0 0
    %572 = vmatprep.subr.bf16.mxu0 0
    %573 = vmatpush1.bf16.msra.mxu0 0
    %574 = vmatprep.mubr.bf16.mxu0 0
    %575 = vmatmul.mubr.bf16.gmra.mrb[0].mxu0 %v540
    %v576 = vpop.f32.mrb[0].mxu0
    %v577 = vadd.f32 0.0, %v576
    %v578 = vpop.f32.mrb[0].mxu0
    %v579 = vadd.f32 0.0, %v578
    %v580 = vpop.f32.mrb[0].mxu0
    %v581 = vpop.f32.mrb[0].mxu0
    %582 = vdwg.mxu0
    %v585 = vrot.slane %v577, 2
    %v586 = vrot.slane %v579, 2
    %v589 = vadd.f32 %v229, %v585
    %v590 = vadd.f32 %v231, %v586
    %v591 = vxor.u32 %v589, 2147483648
    %v592 = vxor.u32 %v590, 2147483648
    %v593 = vmul.f32 %v591, 1.442695
    %v594 = vpow.pop %v593
    %v595 = vmul.f32 %v592, 1.442695
    %v596 = vpow.pop %v595
    %v597 = vadd.f32 %v594, 1.0
    %v598 = vadd.f32 %v596, 1.0
    %v599 = vrcp.pop %v597
    %v600 = vmul.f32 1.0, %v599
    %v601 = vrcp.pop %v598
    %v602 = vmul.f32 1.0, %v601
    %v603 = vtanh.pop %v590
    %v605 = vrot.slane %v529, 6
    %v607 = vmul.f32 %v600, %v605
    %609 = vrot.lane.b32.xlu0 %v603, 64
    %v610 = vpop.permute.xlu0 %609
    %v612 = vmul.f32 %v600, %v610
    %614 = vrot.lane.b32.xlu0 %v612, 64
    %v615 = vpop.permute.xlu0 %614
    %v617 = vadd.f32 %v607, %v615
    %v618 = vtanh.pop %v617
    %620 = vrot.lane.b32.xlu0 %v618, 64
    %v621 = vpop.permute.xlu0 %620
    %v623 = vmul.f32 %v602, %v621
    %v624 = vpack.c.bf16 %v623, %v623
    %v626 = vrot.slane %v624, 3
    %v628 = vsel %vm285, %v626, 0
    %630 = vmatprep.subr.bf16.mxu0 %v270
    %631 = vmatpush1.bf16.msra.mxu0 %v269
    %632 = vmatprep.subr.bf16.mxu0 %v272
    %633 = vmatpush1.bf16.msra.mxu0 %v271
    %634 = vmatprep.subr.bf16.mxu0 %v274
    %635 = vmatpush1.bf16.msra.mxu0 %v273
    %636 = vmatprep.subr.bf16.mxu0 %v276
    %637 = vmatpush1.bf16.msra.mxu0 %v275
    %638 = vmatprep.subr.bf16.mxu0 0
    %639 = vmatpush1.bf16.msra.mxu0 0
    %640 = vmatprep.subr.bf16.mxu0 0
    %641 = vmatpush1.bf16.msra.mxu0 0
    %642 = vmatprep.subr.bf16.mxu0 0
    %643 = vmatpush1.bf16.msra.mxu0 0
    %644 = vmatprep.subr.bf16.mxu0 0
    %645 = vmatpush1.bf16.msra.mxu0 0
    %646 = vmatprep.subr.bf16.mxu0 0
    %647 = vmatpush1.bf16.msra.mxu0 0
    %648 = vmatprep.subr.bf16.mxu0 0
    %649 = vmatpush1.bf16.msra.mxu0 0
    %650 = vmatprep.subr.bf16.mxu0 0
    %651 = vmatpush1.bf16.msra.mxu0 0
    %652 = vmatprep.subr.bf16.mxu0 0
    %653 = vmatpush1.bf16.msra.mxu0 0
    %654 = vmatprep.subr.bf16.mxu0 0
    %655 = vmatpush1.bf16.msra.mxu0 0
    %656 = vmatprep.subr.bf16.mxu0 0
    %657 = vmatpush1.bf16.msra.mxu0 0
    %658 = vmatprep.subr.bf16.mxu0 0
    %659 = vmatpush1.bf16.msra.mxu0 0
    %660 = vmatprep.subr.bf16.mxu0 0
    %661 = vmatpush1.bf16.msra.mxu0 0
    %662 = vmatprep.mubr.bf16.mxu0 0
    %663 = vmatmul.mubr.bf16.gmra.mrb[0].mxu0 %v628
    %v664 = vpop.f32.mrb[0].mxu0
    %v665 = vadd.f32 0.0, %v664
    %v666 = vpop.f32.mrb[0].mxu0
    %v667 = vadd.f32 0.0, %v666
    %v668 = vpop.f32.mrb[0].mxu0
    %v669 = vpop.f32.mrb[0].mxu0
    %670 = vdwg.mxu0
    %v671 = vadd.f32 %v233, %v665
    %v672 = vadd.f32 %v235, %v667
    %v673 = vxor.u32 %v671, 2147483648
    %v674 = vxor.u32 %v672, 2147483648
    %v675 = vmul.f32 %v673, 1.442695
    %v676 = vpow.pop %v675
    %v677 = vmul.f32 %v674, 1.442695
    %v678 = vpow.pop %v677
    %v679 = vadd.f32 %v676, 1.0
    %v680 = vadd.f32 %v678, 1.0
    %v681 = vrcp.pop %v679
    %v682 = vmul.f32 1.0, %v681
    %v683 = vrcp.pop %v680
    %v684 = vmul.f32 1.0, %v683
    %v685 = vtanh.pop %v672
    %v687 = vrot.slane %v617, 6
    %v689 = vmul.f32 %v682, %v687
    %691 = vrot.lane.b32.xlu0 %v685, 64
    %v692 = vpop.permute.xlu0 %691
    %v694 = vmul.f32 %v682, %v692
    %696 = vrot.lane.b32.xlu0 %v694, 64
    %v697 = vpop.permute.xlu0 %696
    %v699 = vadd.f32 %v689, %v697
    %v700 = vtanh.pop %v699
    %702 = vrot.lane.b32.xlu0 %v700, 64
    %v703 = vpop.permute.xlu0 %702
    %v705 = vmul.f32 %v684, %v703
    %v706 = vpack.c.bf16 %v705, %v705
    %v708 = vsel %vm285, %v706, 0
    %710 = vmatprep.subr.bf16.mxu0 %v270
    %711 = vmatpush1.bf16.msra.mxu0 %v269
    %712 = vmatprep.subr.bf16.mxu0 %v272
    %713 = vmatpush1.bf16.msra.mxu0 %v271
    %714 = vmatprep.subr.bf16.mxu0 %v274
    %715 = vmatpush1.bf16.msra.mxu0 %v273
    %716 = vmatprep.subr.bf16.mxu0 %v276
    %717 = vmatpush1.bf16.msra.mxu0 %v275
    %718 = vmatprep.subr.bf16.mxu0 0
    %719 = vmatpush1.bf16.msra.mxu0 0
    %720 = vmatprep.subr.bf16.mxu0 0
    %721 = vmatpush1.bf16.msra.mxu0 0
    %722 = vmatprep.subr.bf16.mxu0 0
    %723 = vmatpush1.bf16.msra.mxu0 0
    %724 = vmatprep.subr.bf16.mxu0 0
    %725 = vmatpush1.bf16.msra.mxu0 0
    %726 = vmatprep.subr.bf16.mxu0 0
    %727 = vmatpush1.bf16.msra.mxu0 0
    %728 = vmatprep.subr.bf16.mxu0 0
    %729 = vmatpush1.bf16.msra.mxu0 0
    %730 = vmatprep.subr.bf16.mxu0 0
    %731 = vmatpush1.bf16.msra.mxu0 0
    %732 = vmatprep.subr.bf16.mxu0 0
    %733 = vmatpush1.bf16.msra.mxu0 0
    %734 = vmatprep.subr.bf16.mxu0 0
    %735 = vmatpush1.bf16.msra.mxu0 0
    %736 = vmatprep.subr.bf16.mxu0 0
    %737 = vmatpush1.bf16.msra.mxu0 0
    %738 = vmatprep.subr.bf16.mxu0 0
    %739 = vmatpush1.bf16.msra.mxu0 0
    %740 = vmatprep.subr.bf16.mxu0 0
    %741 = vmatpush1.bf16.msra.mxu0 0
    %742 = vmatprep.mubr.bf16.mxu0 0
    %743 = vmatmul.mubr.bf16.gmra.mrb[0].mxu0 %v708
    %v744 = vpop.f32.mrb[0].mxu0
    %v745 = vadd.f32 0.0, %v744
    %v746 = vpop.f32.mrb[0].mxu0
    %v747 = vadd.f32 0.0, %v746
    %v748 = vpop.f32.mrb[0].mxu0
    %v749 = vpop.f32.mrb[0].mxu0
    %750 = vdwg.mxu0
    %v753 = vrot.slane %v745, 6
    %v754 = vrot.slane %v747, 6
    %v757 = vadd.f32 %v233, %v753
    %v758 = vadd.f32 %v235, %v754
    %v759 = vxor.u32 %v757, 2147483648
    %v760 = vxor.u32 %v758, 2147483648
    %v761 = vmul.f32 %v759, 1.442695
    %v762 = vpow.pop %v761
    %v763 = vmul.f32 %v760, 1.442695
    %v764 = vpow.pop %v763
    %v765 = vadd.f32 %v762, 1.0
    %v766 = vadd.f32 %v764, 1.0
    %v767 = vrcp.pop %v765
    %v768 = vmul.f32 1.0, %v767
    %v769 = vrcp.pop %v766
    %v770 = vmul.f32 1.0, %v769
    %v771 = vtanh.pop %v758
    %v773 = vrot.slane %v699, 6
    %v775 = vmul.f32 %v768, %v773
    %777 = vrot.lane.b32.xlu0 %v771, 64
    %v778 = vpop.permute.xlu0 %777
    %v780 = vmul.f32 %v768, %v778
    %782 = vrot.lane.b32.xlu0 %v780, 64
    %v783 = vpop.permute.xlu0 %782
    %v785 = vadd.f32 %v775, %v783
    %v786 = vtanh.pop %v785
    %788 = vrot.lane.b32.xlu0 %v786, 64
    %v789 = vpop.permute.xlu0 %788
    %v791 = vmul.f32 %v770, %v789
    %v792 = vpack.c.bf16 %v791, %v791
    %v794 = vrot.slane %v792, 1
    %v796 = vsel %vm285, %v794, 0
    %798 = vmatprep.subr.bf16.mxu0 %v270
    %799 = vmatpush1.bf16.msra.mxu0 %v269
    %800 = vmatprep.subr.bf16.mxu0 %v272
    %801 = vmatpush1.bf16.msra.mxu0 %v271
    %802 = vmatprep.subr.bf16.mxu0 %v274
    %803 = vmatpush1.bf16.msra.mxu0 %v273
    %804 = vmatprep.subr.bf16.mxu0 %v276
    %805 = vmatpush1.bf16.msra.mxu0 %v275
    %806 = vmatprep.subr.bf16.mxu0 0
    %807 = vmatpush1.bf16.msra.mxu0 0
    %808 = vmatprep.subr.bf16.mxu0 0
    %809 = vmatpush1.bf16.msra.mxu0 0
    %810 = vmatprep.subr.bf16.mxu0 0
    %811 = vmatpush1.bf16.msra.mxu0 0
    %812 = vmatprep.subr.bf16.mxu0 0
    %813 = vmatpush1.bf16.msra.mxu0 0
    %814 = vmatprep.subr.bf16.mxu0 0
    %815 = vmatpush1.bf16.msra.mxu0 0
    %816 = vmatprep.subr.bf16.mxu0 0
    %817 = vmatpush1.bf16.msra.mxu0 0
    %818 = vmatprep.subr.bf16.mxu0 0
    %819 = vmatpush1.bf16.msra.mxu0 0
    %820 = vmatprep.subr.bf16.mxu0 0
    %821 = vmatpush1.bf16.msra.mxu0 0
    %822 = vmatprep.subr.bf16.mxu0 0
    %823 = vmatpush1.bf16.msra.mxu0 0
    %824 = vmatprep.subr.bf16.mxu0 0
    %825 = vmatpush1.bf16.msra.mxu0 0
    %826 = vmatprep.subr.bf16.mxu0 0
    %827 = vmatpush1.bf16.msra.mxu0 0
    %828 = vmatprep.subr.bf16.mxu0 0
    %829 = vmatpush1.bf16.msra.mxu0 0
    %830 = vmatprep.mubr.bf16.mxu0 0
    %831 = vmatmul.mubr.bf16.gmra.mrb[0].mxu0 %v796
    %v832 = vpop.f32.mrb[0].mxu0
    %v833 = vadd.f32 0.0, %v832
    %v834 = vpop.f32.mrb[0].mxu0
    %v835 = vadd.f32 0.0, %v834
    %v836 = vpop.f32.mrb[0].mxu0
    %v837 = vpop.f32.mrb[0].mxu0
    %838 = vdwg.mxu0
    %v841 = vrot.slane %v833, 4
    %v842 = vrot.slane %v835, 4
    %v845 = vadd.f32 %v233, %v841
    %v846 = vadd.f32 %v235, %v842
    %v847 = vxor.u32 %v845, 2147483648
    %v848 = vxor.u32 %v846, 2147483648
    %v849 = vmul.f32 %v847, 1.442695
    %v850 = vpow.pop %v849
    %v851 = vmul.f32 %v848, 1.442695
    %v852 = vpow.pop %v851
    %v853 = vadd.f32 %v850, 1.0
    %v854 = vadd.f32 %v852, 1.0
    %v855 = vrcp.pop %v853
    %v856 = vmul.f32 1.0, %v855
    %v857 = vrcp.pop %v854
    %v858 = vmul.f32 1.0, %v857
    %v859 = vtanh.pop %v846
    %v861 = vrot.slane %v785, 6
    %v863 = vmul.f32 %v856, %v861
    %865 = vrot.lane.b32.xlu0 %v859, 64
    %v866 = vpop.permute.xlu0 %865
    %v868 = vmul.f32 %v856, %v866
    %870 = vrot.lane.b32.xlu0 %v868, 64
    %v871 = vpop.permute.xlu0 %870
    %v873 = vadd.f32 %v863, %v871
    %v874 = vtanh.pop %v873
    %876 = vrot.lane.b32.xlu0 %v874, 64
    %v877 = vpop.permute.xlu0 %876
    %v879 = vmul.f32 %v858, %v877
    %v880 = vpack.c.bf16 %v879, %v879
    %v882 = vrot.slane %v880, 2
    %v884 = vsel %vm285, %v882, 0
    %886 = vmatprep.subr.bf16.mxu0 %v270
    %887 = vmatpush1.bf16.msra.mxu0 %v269
    %888 = vmatprep.subr.bf16.mxu0 %v272
    %889 = vmatpush1.bf16.msra.mxu0 %v271
    %890 = vmatprep.subr.bf16.mxu0 %v274
    %891 = vmatpush1.bf16.msra.mxu0 %v273
    %892 = vmatprep.subr.bf16.mxu0 %v276
    %893 = vmatpush1.bf16.msra.mxu0 %v275
    %894 = vmatprep.subr.bf16.mxu0 0
    %895 = vmatpush1.bf16.msra.mxu0 0
    %896 = vmatprep.subr.bf16.mxu0 0
    %897 = vmatpush1.bf16.msra.mxu0 0
    %898 = vmatprep.subr.bf16.mxu0 0
    %899 = vmatpush1.bf16.msra.mxu0 0
    %900 = vmatprep.subr.bf16.mxu0 0
    %901 = vmatpush1.bf16.msra.mxu0 0
    %902 = vmatprep.subr.bf16.mxu0 0
    %903 = vmatpush1.bf16.msra.mxu0 0
    %904 = vmatprep.subr.bf16.mxu0 0
    %905 = vmatpush1.bf16.msra.mxu0 0
    %906 = vmatprep.subr.bf16.mxu0 0
    %907 = vmatpush1.bf16.msra.mxu0 0
    %908 = vmatprep.subr.bf16.mxu0 0
    %909 = vmatpush1.bf16.msra.mxu0 0
    %910 = vmatprep.subr.bf16.mxu0 0
    %911 = vmatpush1.bf16.msra.mxu0 0
    %912 = vmatprep.subr.bf16.mxu0 0
    %913 = vmatpush1.bf16.msra.mxu0 0
    %914 = vmatprep.subr.bf16.mxu0 0
    %915 = vmatpush1.bf16.msra.mxu0 0
    %916 = vmatprep.subr.bf16.mxu0 0
    %917 = vmatpush1.bf16.msra.mxu0 0
    %918 = vmatprep.mubr.bf16.mxu0 0
    %919 = vmatmul.mubr.bf16.gmra.mrb[0].mxu0 %v884
    %v920 = vpop.f32.mrb[0].mxu0
    %v921 = vadd.f32 0.0, %v920
    %v922 = vpop.f32.mrb[0].mxu0
    %v923 = vadd.f32 0.0, %v922
    %v924 = vpop.f32.mrb[0].mxu0
    %v925 = vpop.f32.mrb[0].mxu0
    %926 = vdwg.mxu0
    %v929 = vrot.slane %v921, 2
    %v930 = vrot.slane %v923, 2
    %v933 = vadd.f32 %v233, %v929
    %v934 = vadd.f32 %v235, %v930
    %v935 = vxor.u32 %v933, 2147483648
    %v936 = vxor.u32 %v934, 2147483648
    %v937 = vmul.f32 %v935, 1.442695
    %v938 = vpow.pop %v937
    %v939 = vmul.f32 %v936, 1.442695
    %v940 = vpow.pop %v939
    %v941 = vadd.f32 %v938, 1.0
    %v942 = vadd.f32 %v940, 1.0
    %v943 = vrcp.pop %v941
    %v944 = vmul.f32 1.0, %v943
    %v945 = vrcp.pop %v942
    %v946 = vmul.f32 1.0, %v945
    %v947 = vtanh.pop %v934
    %v949 = vrot.slane %v873, 6
    %v951 = vmul.f32 %v944, %v949
    %953 = vrot.lane.b32.xlu0 %v947, 64
    %v954 = vpop.permute.xlu0 %953
    %v956 = vmul.f32 %v944, %v954
    %958 = vrot.lane.b32.xlu0 %v956, 64
    %v959 = vpop.permute.xlu0 %958
    %v961 = vadd.f32 %v951, %v959
    %v962 = vtanh.pop %v961
    %964 = vrot.lane.b32.xlu0 %v962, 64
    %v965 = vpop.permute.xlu0 %964
    %v967 = vmul.f32 %v946, %v965
    %v968 = vld [vmem:[%s4] sm:$0x1]
    %v969 = vld [vmem:[#allocation2] sm:$0x1]
    %v971 = vlaneseq
    %v972 = vshrl.u32 %v971, 7
    %v973 = vsub.s32 0, %v972
    %v974 = vrot.slane %v968, %v973
    %v976 = vmul.f32 %v361, %v974
    %v977 = vmul.f32 %v967, %v974
    %v979 = vrot.slane %v977, 6
    %980 = vrot.lane.b32.xlu0 %v979, 96
    %v981 = vpop.permute.xlu0 %980
    %v983 = vadd.f32 %v976, %v981
    %vm984 = vcmask 254976
    %v985 = vsel %vm984, %v983, 0.0
    %986 = vadd.xlane.f32.xlu0 %v985
    %v987 = vpop.xlane.xlu0 %986
    %v989 = vlaneseq
    %v990 = vshrl.u32 %v989, 7
    %v991 = vsub.s32 0, %v990
    %v992 = vrot.slane %v969, %v991
    %v994 = vadd.f32 %v987, %v992
    %v995 = vtanh.pop %v994
    %v996 = vmul.f32 %v995, 1.442695
    %v997 = vpow.pop %v996
    %v998 = vadd.f32 %v997, 0.0
    %v999 = vmul.f32 %v447, %v974
    %v1000 = vmul.f32 %v879, %v974
    %v1002 = vrot.slane %v1000, 2
    %1003 = vrot.lane.b32.xlu0 %v1002, 96
    %v1004 = vpop.permute.xlu0 %1003
    %v1006 = vadd.f32 %v999, %v1004
    %vm1007 = vcmask 257026
    %v1008 = vsel %vm1007, %v1006, 0.0
    %1009 = vadd.xlane.f32.xlu0 %v1008
    %v1010 = vpop.xlane.xlu0 %1009
    %v1011 = vadd.f32 %v1010, %v992
    %v1012 = vtanh.pop %v1011
    %v1013 = vmul.f32 %v1012, 1.442695
    %v1014 = vpow.pop %v1013
    %v1016 = vrot.slane %v1014, 2
    %v1018 = vadd.f32 %v998, %v1016
    %v1019 = vmul.f32 %v535, %v974
    %v1020 = vmul.f32 %v791, %v974
    %v1022 = vrot.slane %v1020, 6
    %1023 = vrot.lane.b32.xlu0 %v1022, 96
    %v1024 = vpop.permute.xlu0 %1023
    %v1026 = vadd.f32 %v1019, %v1024
    %vm1027 = vcmask 259076
    %v1028 = vsel %vm1027, %v1026, 0.0
    %1029 = vadd.xlane.f32.xlu0 %v1028
    %v1030 = vpop.xlane.xlu0 %1029
    %v1031 = vadd.f32 %v1030, %v992
    %v1032 = vtanh.pop %v1031
    %v1033 = vmul.f32 %v1032, 1.442695
    %v1034 = vpow.pop %v1033
    %v1036 = vrot.slane %v1034, 4
    %v1038 = vadd.f32 %v1018, %v1036
    %v1039 = vmul.f32 %v623, %v974
    %v1040 = vmul.f32 %v705, %v974
    %v1042 = vrot.slane %v1040, 2
    %1043 = vrot.lane.b32.xlu0 %v1042, 96
    %v1044 = vpop.permute.xlu0 %1043
    %v1046 = vadd.f32 %v1039, %v1044
    %vm1047 = vcmask 261126
    %v1048 = vsel %vm1047, %v1046, 0.0
    %1049 = vadd.xlane.f32.xlu0 %v1048
    %v1050 = vpop.xlane.xlu0 %1049
    %v1051 = vadd.f32 %v1050, %v992
    %v1052 = vtanh.pop %v1051
    %v1053 = vmul.f32 %v1052, 1.442695
    %v1054 = vpow.pop %v1053
    %v1056 = vrot.slane %v1054, 6
    %v1058 = vadd.f32 %v1038, %v1056
    %v1060 = vrot.slane %v1039, 6
    %1061 = vrot.lane.b32.xlu0 %v1060, 96
    %v1062 = vpop.permute.xlu0 %1061
    %v1064 = vadd.f32 %v1040, %v1062
    %v1065 = vsel %vm984, %v1064, 0.0
    %1066 = vadd.xlane.f32.xlu0 %v1065
    %v1067 = vpop.xlane.xlu0 %1066
    %v1068 = vadd.f32 %v1067, %v992
    %v1069 = vtanh.pop %v1068
    %v1070 = vmul.f32 %v1069, 1.442695
    %v1071 = vpow.pop %v1070
    %v1072 = vadd.f32 %v1058, %v1071
    %v1074 = vrot.slane %v1019, 2
    %1075 = vrot.lane.b32.xlu0 %v1074, 96
    %v1076 = vpop.permute.xlu0 %1075
    %v1078 = vadd.f32 %v1020, %v1076
    %v1079 = vsel %vm1007, %v1078, 0.0
    %1080 = vadd.xlane.f32.xlu0 %v1079
    %v1081 = vpop.xlane.xlu0 %1080
    %v1082 = vadd.f32 %v1081, %v992
    %v1083 = vtanh.pop %v1082
    %v1084 = vmul.f32 %v1083, 1.442695
    %v1085 = vpow.pop %v1084
    %v1087 = vrot.slane %v1085, 2
    %v1089 = vadd.f32 %v1072, %v1087
    %v1091 = vrot.slane %v999, 6
    %1092 = vrot.lane.b32.xlu0 %v1091, 96
    %v1093 = vpop.permute.xlu0 %1092
    %v1095 = vadd.f32 %v1000, %v1093
    %v1096 = vsel %vm1027, %v1095, 0.0
    %1097 = vadd.xlane.f32.xlu0 %v1096
    %v1098 = vpop.xlane.xlu0 %1097
    %v1099 = vadd.f32 %v1098, %v992
    %v1100 = vtanh.pop %v1099
    %v1101 = vmul.f32 %v1100, 1.442695
    %v1102 = vpow.pop %v1101
    %v1104 = vrot.slane %v1102, 4
    %v1106 = vadd.f32 %v1089, %v1104
    %v1108 = vrot.slane %v976, 2
    %1109 = vrot.lane.b32.xlu0 %v1108, 96
    %v1110 = vpop.permute.xlu0 %1109
    %v1112 = vadd.f32 %v977, %v1110
    %v1113 = vsel %vm1047, %v1112, 0.0
    %1114 = vadd.xlane.f32.xlu0 %v1113
    %v1115 = vpop.xlane.xlu0 %1114
    %v1116 = vadd.f32 %v1115, %v992
    %v1117 = vtanh.pop %v1116
    %v1118 = vmul.f32 %v1117, 1.442695
    %v1119 = vpow.pop %v1118
    %v1121 = vrot.slane %v1119, 6
    %v1123 = vadd.f32 %v1106, %v1121
    %v1124 = vrcp.pop %v1123
    %v1125 = vmul.f32 %v997, %v1124
    %1127 = vset.pattern.permute.xlu0 0
    %1128 = vperm.xlu0 %1127, %v1125
    %v1129 = vpop.permute.xlu0 %1128
    %v1131 = vmul.f32 %v1129, %v361
    %v1132 = vadd.f32 %v1131, 0.0
    %v1134 = vrot.slane %v967, 6
    %1135 = vrot.lane.b32.xlu0 %v1134, 96
    %v1136 = vpop.permute.xlu0 %1135
    %v1138 = vmul.f32 %v1129, %v1136
    %v1139 = vadd.f32 %v1138, 0.0
    %v1141 = vrot.slane %v1124, 6
    %v1143 = vmul.f32 %v1014, %v1141
    %1145 = vset.pattern.permute.xlu0 0
    %1146 = vperm.xlu0 %1145, %v1143
    %v1147 = vpop.permute.xlu0 %1146
    %v1149 = vmul.f32 %v1147, %v447
    %v1151 = vrot.slane %v1149, 2
    %v1153 = vadd.f32 %v1132, %v1151
    %v1155 = vrot.slane %v879, 2
    %1156 = vrot.lane.b32.xlu0 %v1155, 96
    %v1157 = vpop.permute.xlu0 %1156
    %v1159 = vmul.f32 %v1147, %v1157
    %v1161 = vrot.slane %v1159, 2
    %v1163 = vadd.f32 %v1139, %v1161
    %v1164 = vrot.slane %v1124, 4
    %v1166 = vmul.f32 %v1034, %v1164
    %1168 = vset.pattern.permute.xlu0 0
    %1169 = vperm.xlu0 %1168, %v1166
    %v1170 = vpop.permute.xlu0 %1169
    %v1172 = vmul.f32 %v1170, %v535
    %v1174 = vrot.slane %v1172, 4
    %v1176 = vadd.f32 %v1153, %v1174
    %v1178 = vrot.slane %v791, 6
    %1179 = vrot.lane.b32.xlu0 %v1178, 96
    %v1180 = vpop.permute.xlu0 %1179
    %v1182 = vmul.f32 %v1170, %v1180
    %v1184 = vrot.slane %v1182, 4
    %v1186 = vadd.f32 %v1163, %v1184
    %v1187 = vrot.slane %v1124, 2
    %v1189 = vmul.f32 %v1054, %v1187
    %1191 = vset.pattern.permute.xlu0 0
    %1192 = vperm.xlu0 %1191, %v1189
    %v1193 = vpop.permute.xlu0 %1192
    %v1195 = vmul.f32 %v1193, %v623
    %v1197 = vrot.slane %v1195, 6
    %v1199 = vadd.f32 %v1176, %v1197
    %v1201 = vrot.slane %v705, 2
    %1202 = vrot.lane.b32.xlu0 %v1201, 96
    %v1203 = vpop.permute.xlu0 %1202
    %v1205 = vmul.f32 %v1193, %v1203
    %v1207 = vrot.slane %v1205, 6
    %v1209 = vadd.f32 %v1186, %v1207
    %v1210 = vmul.f32 %v1071, %v1124
    %1212 = vset.pattern.permute.xlu0 0
    %1213 = vperm.xlu0 %1212, %v1210
    %v1214 = vpop.permute.xlu0 %1213
    %v1216 = vmul.f32 %v1214, %v705
    %v1217 = vadd.f32 %v1199, %v1216
    %v1219 = vrot.slane %v623, 6
    %1220 = vrot.lane.b32.xlu0 %v1219, 96
    %v1221 = vpop.permute.xlu0 %1220
    %v1223 = vmul.f32 %v1214, %v1221
    %v1224 = vadd.f32 %v1209, %v1223
    %v1225 = vmul.f32 %v1085, %v1141
    %1227 = vset.pattern.permute.xlu0 0
    %1228 = vperm.xlu0 %1227, %v1225
    %v1229 = vpop.permute.xlu0 %1228
    %v1231 = vmul.f32 %v1229, %v791
    %v1233 = vrot.slane %v1231, 2
    %v1235 = vadd.f32 %v1217, %v1233
    %v1237 = vrot.slane %v535, 2
    %1238 = vrot.lane.b32.xlu0 %v1237, 96
    %v1239 = vpop.permute.xlu0 %1238
    %v1241 = vmul.f32 %v1229, %v1239
    %v1243 = vrot.slane %v1241, 2
    %v1245 = vadd.f32 %v1224, %v1243
    %v1246 = vmul.f32 %v1102, %v1164
    %1248 = vset.pattern.permute.xlu0 0
    %1249 = vperm.xlu0 %1248, %v1246
    %v1250 = vpop.permute.xlu0 %1249
    %v1252 = vmul.f32 %v1250, %v879
    %v1254 = vrot.slane %v1252, 4
    %v1256 = vadd.f32 %v1235, %v1254
    %v1258 = vrot.slane %v447, 6
    %1259 = vrot.lane.b32.xlu0 %v1258, 96
    %v1260 = vpop.permute.xlu0 %1259
    %v1262 = vmul.f32 %v1250, %v1260
    %v1264 = vrot.slane %v1262, 4
    %v1266 = vadd.f32 %v1245, %v1264
    %v1267 = vmul.f32 %v1119, %v1187
    %1269 = vset.pattern.permute.xlu0 0
    %1270 = vperm.xlu0 %1269, %v1267
    %v1271 = vpop.permute.xlu0 %1270
    %v1273 = vmul.f32 %v1271, %v967
    %v1275 = vrot.slane %v1273, 6
    %v1277 = vadd.f32 %v1256, %v1275
    %v1279 = vrot.slane %v361, 2
    %1280 = vrot.lane.b32.xlu0 %v1279, 96
    %v1281 = vpop.permute.xlu0 %1280
    %v1283 = vmul.f32 %v1271, %v1281
    %v1285 = vrot.slane %v1283, 6
    %v1287 = vadd.f32 %v1266, %v1285
    %1289 = vrot.lane.b32.xlu0 %v1287, 32
    %v1290 = vpop.permute.xlu0 %1289
    %vm1292 = vcmask 261120
    %v1293 = vsel %vm1292, %v1277, %v1290
    %v1294 = vpack.c.bf16 %v1293, %v1293
    %v1295 = vld [vmem:[%s6] sm:$0xf]
    %v1296 = vld [vmem:[%s6 + $0x4] sm:$0xf]
    %v1297 = vld [vmem:[%s6 + $0x8] sm:$0xf]
    %v1298 = vld [vmem:[%s6 + $0xc] sm:$0xf]
    %v1299 = vld [vmem:[%s6 + $0x10] sm:$0xf]
    %v1300 = vld [vmem:[%s6 + $0x14] sm:$0xf]
    %v1301 = vld [vmem:[%s6 + $0x18] sm:$0xf]
    %v1302 = vld [vmem:[%s6 + $0x1c] sm:$0xf]
    %v1303 = vld [vmem:[%s7] sm:$0x1]
    %v1305 = vlaneseq
    %v1306 = vshrl.u32 %v1305, 7
    %v1307 = vsub.s32 0, %v1306
    %v1308 = vrot.slane %v1303, %v1307
    %v1318 = vunpack.c.l.b16 %v1295
    %v1319 = vunpack.c.l.b16 %v1296
    %v1320 = vunpack.c.l.b16 %v1297
    %v1321 = vunpack.c.l.b16 %v1298
    %v1322 = vunpack.c.l.b16 %v1299
    %v1323 = vunpack.c.l.b16 %v1300
    %v1324 = vunpack.c.l.b16 %v1301
    %v1325 = vunpack.c.l.b16 %v1302
    %v1326 = vpack.c.b16 %v1319, %v1318
    %v1327 = vpack.c.b16 %v1321, %v1320
    %v1328 = vpack.c.b16 %v1323, %v1322
    %v1329 = vpack.c.b16 %v1325, %v1324
    %v1335 = vsel %vm285, %v1294, 0
    %1337 = vmatprep.subr.bf16.mxu0 0
    %1338 = vmatpush1.bf16.msra.mxu0 %v1326
    %1339 = vmatprep.subr.bf16.mxu0 0
    %1340 = vmatpush1.bf16.msra.mxu0 %v1327
    %1341 = vmatprep.subr.bf16.mxu0 0
    %1342 = vmatpush1.bf16.msra.mxu0 %v1328
    %1343 = vmatprep.subr.bf16.mxu0 0
    %1344 = vmatpush1.bf16.msra.mxu0 %v1329
    %1345 = vmatprep.subr.bf16.mxu0 0
    %1346 = vmatpush1.bf16.msra.mxu0 0
    %1347 = vmatprep.subr.bf16.mxu0 0
    %1348 = vmatpush1.bf16.msra.mxu0 0
    %1349 = vmatprep.subr.bf16.mxu0 0
    %1350 = vmatpush1.bf16.msra.mxu0 0
    %1351 = vmatprep.subr.bf16.mxu0 0
    %1352 = vmatpush1.bf16.msra.mxu0 0
    %1353 = vmatprep.subr.bf16.mxu0 0
    %1354 = vmatpush1.bf16.msra.mxu0 0
    %1355 = vmatprep.subr.bf16.mxu0 0
    %1356 = vmatpush1.bf16.msra.mxu0 0
    %1357 = vmatprep.subr.bf16.mxu0 0
    %1358 = vmatpush1.bf16.msra.mxu0 0
    %1359 = vmatprep.subr.bf16.mxu0 0
    %1360 = vmatpush1.bf16.msra.mxu0 0
    %1361 = vmatprep.subr.bf16.mxu0 0
    %1362 = vmatpush1.bf16.msra.mxu0 0
    %1363 = vmatprep.subr.bf16.mxu0 0
    %1364 = vmatpush1.bf16.msra.mxu0 0
    %1365 = vmatprep.subr.bf16.mxu0 0
    %1366 = vmatpush1.bf16.msra.mxu0 0
    %1367 = vmatprep.subr.bf16.mxu0 0
    %1368 = vmatpush1.bf16.msra.mxu0 0
    %1369 = vmatprep.mubr.bf16.mxu0 0
    %1370 = vmatmul.mubr.bf16.gmra.mrb[0].mxu0 %v1335
    %v1371 = vpop.f32.mrb[0].mxu0
    %v1372 = vadd.f32 %v1308, %v1371
    %v1373 = vpop.f32.mrb[0].mxu0
    %v1374 = vpop.f32.mrb[0].mxu0
    %v1375 = vpop.f32.mrb[0].mxu0
    %1376 = vdwg.mxu0
    %1377 = vst [vmem:[#allocation8] sm:$0x3] %v1372
    // Predicated region
    $region42: #{tpu_custom_call.1} parent=1 // pred_check
      _
    $region43: #{tpu_custom_call.1} parent=1 // pred_check_branch
      %1379 = sbr.rel (0) target = $region45
    $region44: #{tpu_custom_call.1} parent=1 // pred_region
      %s1381 = ssub.s32 32, 32
      %1382 = vsyncadd [#allocation5], %s1381
      %s1384 = sshll.u32 [#allocation8], 4
      %s1385 = int_to_ptr.vmem [resolvable:$true] %s1384
      %1387 = dma.vmem_to_hbm [thread:$0]  %s1385, 32, %s8, [#allocation5]
    $region45: #{tpu_custom_call.1} parent=1 // pred_fallthru
      _
    // Predicated region
    $region46: #{tpu_custom_call.1} parent=1 // pred_check
      _
    $region47: #{tpu_custom_call.1} parent=1 // pred_check_branch
      %1389 = sbr.rel (0) target = $region49
    $region48: #{tpu_custom_call.1} parent=1 // pred_region
      %1390 = dma.done [#allocation5], 32
    $region49: #{tpu_custom_call.1} parent=1 // pred_fallthru
      _
    %1391 = vsyncpa [#allocation4], 1
    %1392 = vsyncpa [#allocation7], 1
    %1393 = vsyncpa [#allocation5], 1

</llo_original>
